<compile_context>
chip_gen: v7x
topology: tpu7x:2x2x1
jax: 0.10.0
libtpu: 0.0.40
codegen_flags: <defaults>
</compile_context>

<pallas_src>
import functools

import jax
import jax.numpy as jnp
from jax import lax
from jax.experimental import pallas as pl
from jax.experimental.pallas import tpu as pltpu

C1 = 2048            # net1 / csam1 channels
C2 = 2208            # net2 / csam2 channels
C_TOTAL = C1 + C2    # 4256 = nn.Linear in-features
C_PAD = 4352         # 4256 padded up to a multiple of 128 lanes
NUM_CLASSES = 7      # nn.Linear(4256, 7)


def _ef_pool_project_kernel(x_ref, wc_ref, o_ref, acc_ref, *, s_total, mask_tail):
    """Streaming global-avg-pool of x, then a one-shot projection to concat(f1, f2).

    x_ref  : (B, Cin, ts)   spatial tile of x, NCHW kept, S on the lane axis
    wc_ref : (Cin, C_PAD)   [w_net1 | w_net2 | zero-pad] concatenated along Cout
    o_ref  : (B, C_PAD)     pooled concatenated features (lane-dense slab)
    acc_ref: (B, Cin) f32   running spatial sum of x
    """
    s = pl.program_id(0)
    ts = x_ref.shape[2]

    @pl.when(s == 0)
    def _init():
        acc_ref[...] = jnp.zeros_like(acc_ref)

    x_tile = x_ref[...].astype(jnp.float32)
    if mask_tail:
        # Tail tile may extend past the true spatial extent; zero the overhang.
        pos = lax.broadcasted_iota(jnp.int32, (1, 1, ts), 2) + s * ts
        x_tile = jnp.where(pos < s_total, x_tile, 0.0)

    # Spatial (lane-axis) reduce of this tile; f1/f2 never materialize anywhere.
    acc_ref[...] += jnp.sum(x_tile, axis=2)

    @pl.when(s == pl.num_programs(0) - 1)
    def _finalize():
        # AdaptiveAvgPool2d((1,1)) over the true spatial size.
        pooled = acc_ref[...] * jnp.float32(1.0 / s_total)
        # One-shot projection == pooled concat([csam1(net1(x)), csam2(net2(x))]).
        # (Runs once; the tiny K=Cin contraction cost is irrelevant here.)
        o_ref[...] = jnp.dot(pooled, wc_ref[...], preferred_element_type=jnp.float32)


def ef_forward(x, params, *, max_ts=8192):
    """x: [B, Cin, H, W] (NCHW, PyTorch convention) -> logits [B, NUM_CLASSES]."""
    B, Cin, H, W = x.shape
    S = H * W

    # Free reshape — no transpose, no padding, no extra HBM pass.
    xf = x.reshape(B, Cin, S)

    # Tile the spatial/lane axis. Either the whole extent (any S), or a 128-multiple tile.
    max_ts = max(128, (max_ts // 128) * 128)
    if S <= max_ts:
        ts = S
        num_tiles = 1
    else:
        ts = max_ts
        num_tiles = pl.cdiv(S, ts)
    mask_tail = (ts * num_tiles != S)

    kernel = functools.partial(_ef_pool_project_kernel,
                               s_total=S, mask_tail=mask_tail)

    pooled_cat = pl.pallas_call(
        kernel,
        out_shape=jax.ShapeDtypeStruct((B, C_PAD), jnp.float32),
        grid_spec=pltpu.PrefetchScalarGridSpec(
            num_scalar_prefetch=0,
            grid=(num_tiles,),
            in_specs=[
                pl.BlockSpec((B, Cin, ts), lambda s: (0, 0, s)),
                pl.BlockSpec((Cin, C_PAD), lambda s: (0, 0)),
            ],
            out_specs=pl.BlockSpec((B, C_PAD), lambda s: (0, 0)),
            scratch_shapes=[pltpu.VMEM((B, Cin), jnp.float32)],
        ),
        compiler_params=pltpu.CompilerParams(
            # The spatial axis is a reduction into the resident accumulator.
            dimension_semantics=("arbitrary",),
            vmem_limit_bytes=32 * 1024 * 1024,
        ),
    )(xf, params["w_cat_pad"])

    # Linear(4256, 7): a 2-row GEMV that runs once — done in the wrapper so its
    # weight never sits (double-buffered) in VMEM during the spatial sweep.
    logits = pooled_cat[:, :C_TOTAL] @ params["w_fc"].T + params["b_fc"]
    return logits


def ef_reference(x, w_net1, w_net2, w_fc, b_fc):
    """Pure-JAX reference of the same forward pass (for correctness checking)."""
    B, Cin, H, W = x.shape
    xf = x.reshape(B, Cin, H * W)
    f1 = jnp.einsum("bcs,cd->bsd", xf, w_net1)   # net1 stand-in; csam1 = identity
    f2 = jnp.einsum("bcs,cd->bsd", xf, w_net2)   # net2 stand-in; csam2 = identity
    pooled = jnp.concatenate([f1.mean(axis=1), f2.mean(axis=1)], axis=1)
    return pooled @ w_fc.T + b_fc                # dropout = identity at inference


if __name__ == "__main__":
    B, Cin, H, W = 2, 4, 16, 16

    key = jax.random.PRNGKey(0)
    k_x, k_w1, k_w2, k_fc, k_b, k_x2 = jax.random.split(key, 6)

    x = jax.random.normal(k_x, (B, Cin, H, W), dtype=jnp.float32)

    # Deterministic synthetic parameters (shapes follow EF.__init__).
    w_net1 = jax.random.normal(k_w1, (Cin, C1), dtype=jnp.float32) * 0.05
    w_net2 = jax.random.normal(k_w2, (Cin, C2), dtype=jnp.float32) * 0.05
    # nn.Linear(4256, 7): weight [7, 4256], bias [7]
    w_fc = jax.random.normal(k_fc, (NUM_CLASSES, C_TOTAL), dtype=jnp.float32) * 0.02
    b_fc = jax.random.normal(k_b, (NUM_CLASSES,), dtype=jnp.float32) * 0.02

    # Pre-packed, lane-aligned kernel parameters.
    w_cat = jnp.concatenate([w_net1, w_net2], axis=1)                  # (Cin, 4256)
    params = {
        "w_cat_pad": jnp.pad(w_cat, ((0, 0), (0, C_PAD - C_TOTAL))),   # (Cin, 4352)
        "w_fc": w_fc,
        "b_fc": b_fc,
    }

    # Check 1: standard shape, single whole-S tile.
    out = jax.block_until_ready(ef_forward(x, params))
    ref = jax.block_until_ready(ef_reference(x, w_net1, w_net2, w_fc, b_fc))
    assert out.shape == (B, NUM_CLASSES), out.shape
    assert jnp.allclose(out, ref, rtol=1e-3, atol=1e-3), (out, ref)

    # Check 2: ragged spatial extent, multi-tile grid + in-kernel tail masking.
    x2 = jax.random.normal(k_x2, (B, Cin, 10, 20), dtype=jnp.float32)   # S = 200
    out2 = jax.block_until_ready(ef_forward(x2, params, max_ts=128))
    ref2 = jax.block_until_ready(ef_reference(x2, w_net1, w_net2, w_fc, b_fc))
    assert out2.shape == (B, NUM_CLASSES), out2.shape
    assert jnp.allclose(out2, ref2, rtol=1e-3, atol=1e-3), (out2, ref2)

    print("KERNEL_OK")
</pallas_src>

<mosaic_0001>
module attributes {stable_mosaic.version = 11 : i64} {
  func.func @_ef_pool_project_kernel(%arg0: i32, %arg1: memref<2x4x256xf32, #tpu.memory_space<vmem>>, %arg2: memref<4x4352xf32, #tpu.memory_space<vmem>>, %arg3: memref<2x4352xf32, #tpu.memory_space<vmem>>, %arg4: memref<2x4xf32, #tpu.memory_space<vmem>>) attributes {dimension_semantics = [#tpu.dimension_semantics<arbitrary>], iteration_bounds = array<i64: 1>, scalar_prefetch = 0 : i64, scratch_operands = 1 : i64, tpu.core_type = #tpu.core_type<tc>, window_params = [{transform_indices = @transform_0, window_bounds = array<i64: 2, 4, 256>}, {pipeline_mode = #tpu.pipeline_mode<synchronous>, transform_indices = @transform_1, window_bounds = array<i64: 4, 4352>}, {pipeline_mode = #tpu.pipeline_mode<synchronous>, transform_indices = @transform_2, window_bounds = array<i64: 2, 4352>}]} {
    %c0_i32 = arith.constant 0 : i32
    %0 = arith.cmpi eq, %arg0, %c0_i32 : i32
    %1 = arith.extui %0 : i1 to i32
    %c0_i32_0 = arith.constant 0 : i32
    %2 = arith.cmpi ne, %1, %c0_i32_0 : i32
    scf.if %2 {
      %cst_9 = arith.constant 0.000000e+00 : f32
      %11 = vector.broadcast %cst_9 : f32 to vector<2x4xf32>
      %c0_10 = arith.constant 0 : index
      %c0_11 = arith.constant 0 : index
      %12 = vector.load %arg4[%c0_10, %c0_11] : memref<2x4xf32, #tpu.memory_space<vmem>>, vector<2x4xf32>
      tpu.vector_store %arg4[%c0_10, %c0_11], %11 {strides = array<i32>} : memref<2x4xf32, #tpu.memory_space<vmem>>, vector<2x4xf32>,
    } else {
    }
    %c0 = arith.constant 0 : index
    %c0_1 = arith.constant 0 : index
    %c0_2 = arith.constant 0 : index
    %3 = vector.load %arg1[%c0, %c0_1, %c0_2] : memref<2x4x256xf32, #tpu.memory_space<vmem>>, vector<2x4x256xf32>
    %c0_3 = arith.constant 0 : index
    %c0_4 = arith.constant 0 : index
    %4 = vector.load %arg4[%c0_3, %c0_4] : memref<2x4xf32, #tpu.memory_space<vmem>>, vector<2x4xf32>
    %cst = arith.constant dense<0.000000e+00> : vector<2x4xf32>
    %5 = vector.multi_reduction <add>, %3, %cst [2] : vector<2x4x256xf32> to vector<2x4xf32>
    %6 = arith.addf %4, %5 : vector<2x4xf32>
    %c0_5 = arith.constant 0 : index
    %c0_6 = arith.constant 0 : index
    %7 = vector.load %arg4[%c0_5, %c0_6] : memref<2x4xf32, #tpu.memory_space<vmem>>, vector<2x4xf32>
    tpu.vector_store %arg4[%c0_5, %c0_6], %6 {strides = array<i32>} : memref<2x4xf32, #tpu.memory_space<vmem>>, vector<2x4xf32>,
    %c0_i32_7 = arith.constant 0 : i32
    %8 = arith.cmpi eq, %arg0, %c0_i32_7 : i32
    %9 = arith.extui %8 : i1 to i32
    %c0_i32_8 = arith.constant 0 : i32
    %10 = arith.cmpi ne, %9, %c0_i32_8 : i32
    scf.if %10 {
      %c0_9 = arith.constant 0 : index
      %c0_10 = arith.constant 0 : index
      %11 = vector.load %arg4[%c0_9, %c0_10] : memref<2x4xf32, #tpu.memory_space<vmem>>, vector<2x4xf32>
      %cst_11 = arith.constant 3.906250e-03 : f32
      %12 = vector.broadcast %cst_11 : f32 to vector<2x4xf32>
      %13 = arith.mulf %11, %12 : vector<2x4xf32>
      %c0_12 = arith.constant 0 : index
      %c0_13 = arith.constant 0 : index
      %14 = vector.load %arg2[%c0_12, %c0_13] : memref<4x4352xf32, #tpu.memory_space<vmem>>, vector<4x4352xf32>
      %cst_14 = arith.constant dense<0.000000e+00> : vector<2x4352xf32>
      %15 = tpu.matmul %13, %14, %cst_14 {dimension_numbers = #tpu.dot_dimension_numbers<[1], [0], [0], [1], [0, 0, 1, 1], [], []>} : vector<2x4xf32>, vector<4x4352xf32>, vector<2x4352xf32> -> vector<2x4352xf32>
      %c0_15 = arith.constant 0 : index
      %c0_16 = arith.constant 0 : index
      %16 = vector.load %arg3[%c0_15, %c0_16] : memref<2x4352xf32, #tpu.memory_space<vmem>>, vector<2x4352xf32>
      tpu.vector_store %arg3[%c0_15, %c0_16], %15 {strides = array<i32>} : memref<2x4352xf32, #tpu.memory_space<vmem>>, vector<2x4352xf32>,
    } else {
    }
    return
  }
  func.func @transform_0(%arg0: i32) -> (i32, i32, i32) {
    %c0_i32 = arith.constant 0 : i32
    %c0_i32_0 = arith.constant 0 : i32
    %c0_i32_1 = arith.constant 0 : i32
    return %c0_i32, %c0_i32_0, %arg0 : i32, i32, i32
  }
  func.func @transform_1(%arg0: i32) -> (i32, i32) {
    %c0_i32 = arith.constant 0 : i32
    %c0_i32_0 = arith.constant 0 : i32
    %c0_i32_1 = arith.constant 0 : i32
    return %c0_i32, %c0_i32_0 : i32, i32
  }
  func.func @transform_2(%arg0: i32) -> (i32, i32) {
    %c0_i32 = arith.constant 0 : i32
    %c0_i32_0 = arith.constant 0 : i32
    %c0_i32_1 = arith.constant 0 : i32
    return %c0_i32, %c0_i32_0 : i32, i32
  }
}

</mosaic_0001>

<llo_original>
// kernel: tpu_custom_call.1
$region0: #{tpu_custom_call.1}
  #allocation0 [shape = 'u32[]', space=smem, size = 0x4, offset = 0x4, fixed_abs, tag = 'smem constant byte address 0x4 - core index']
  #allocation1 [shape = 'u32[144,128]{1,0:T(1,128)}', space=vmem, size = 0x12000, scoped, tag = 'internal scratch']
  #allocation2 [shape = 'f32[2,4]{1,0:T(2,128)}', space=vmem, size = 0x400, scoped, tag = 'scratch operand']
  %s0 = inlined_call_operand.hbm [shape: f32[2,4,256], index: 0, kind: input, shape index: {}]
  %s1 = inlined_call_operand.hbm [shape: f32[4,4352], index: 1, kind: input, shape index: {}]
  %s2 = inlined_call_operand.hbm [shape: f32[2,4352], index: 2, kind: output, shape index: {}]
  %s3 = sld [smem:[#allocation0]]
  $region34: #{tpu_custom_call.1} parent=0
    _
  %s5 = ssub.s32 1, %s3
  %s6 = scalar_select 0, %s5, %s3
  $region1: #{tpu_custom_call.1} parent=0
    #allocation3 [shape = 'u8[8192]{0}', space=vmem, size = 0x2000, scoped, tag = 'input window, operand 0, single buffered']
    #allocation4 [shape = 's32[1]{0}', space=sflag, size = 0x4, scoped, tag = 'scoped memory for tpu_custom_call.1']
    #allocation5 [shape = 's32[1]{0}', space=sflag, size = 0x4, scoped, tag = 'scoped memory for tpu_custom_call.1']
    #allocation6 [shape = 'u8[69632]{0}', space=vmem, size = 0x11000, scoped, tag = 'input window, operand 1, single buffered']
    #allocation7 [shape = 's32[1]{0}', space=sflag, size = 0x4, scoped, tag = 'scoped memory for tpu_custom_call.1']
    #allocation8 [shape = 'u8[34816]{0}', space=vmem, size = 0x8800, scoped, tag = 'output window, operand 0, single buffered']
    %7 = vsyncpa [#allocation4], 0
    %8 = vsyncpa [#allocation7], 0
    %9 = vsyncpa [#allocation5], 0
    // Predicated region
    $region2: #{tpu_custom_call.1} parent=1 // pred_check
      _
    $region3: #{tpu_custom_call.1} parent=1 // pred_check_branch
      %11 = sbr.rel (0) target = $region5
    $region4: #{tpu_custom_call.1} parent=1 // pred_region
      %s13 = ssub.s32 256, 256
      %14 = vsyncadd [#allocation4], %s13
      %s15 = sshll.u32 [#allocation3], 4
      %s16 = int_to_ptr.vmem [resolvable:$true] %s15
      %21 = dma.hbm_to_vmem [thread:$0]  %s0, 256, %s16, [#allocation4], 128, 128, 8
    $region5: #{tpu_custom_call.1} parent=1 // pred_fallthru
      _
    // Predicated region
    $region6: #{tpu_custom_call.1} parent=1 // pred_check
      _
    $region7: #{tpu_custom_call.1} parent=1 // pred_check_branch
      %23 = sbr.rel (0) target = $region9
    $region8: #{tpu_custom_call.1} parent=1 // pred_region
      %s25 = ssub.s32 2176, 2176
      %26 = vsyncadd [#allocation7], %s25
      %s28 = sshll.u32 [#allocation6], 4
      %s29 = int_to_ptr.vmem [resolvable:$true] %s28
      %31 = dma.hbm_to_vmem [thread:$0]  %s1, 2176, %s29, [#allocation7]
    $region9: #{tpu_custom_call.1} parent=1 // pred_fallthru
      _
    // Predicated region
    $region10: #{tpu_custom_call.1} parent=1 // pred_check
      _
    $region11: #{tpu_custom_call.1} parent=1 // pred_check_branch
      %33 = sbr.rel (0) target = $region13
    $region12: #{tpu_custom_call.1} parent=1 // pred_region
      %34 = dma.done [#allocation4], 256
    $region13: #{tpu_custom_call.1} parent=1 // pred_fallthru
      _
    // Predicated region
    $region14: #{tpu_custom_call.1} parent=1 // pred_check
      _
    $region15: #{tpu_custom_call.1} parent=1 // pred_check_branch
      %36 = sbr.rel (0) target = $region17
    $region16: #{tpu_custom_call.1} parent=1 // pred_region
      %37 = dma.done [#allocation7], 2176
    $region17: #{tpu_custom_call.1} parent=1 // pred_fallthru
      _
    %p38 = scmp.eq.s32.totalorder 0, 0
    // Predicated region
    $region18: #{tpu_custom_call.1} parent=1 // pred_check
      %p39 = pneg %p38
    $region19: #{tpu_custom_call.1} parent=1 // pred_check_branch
      %41 = sbr.rel (%p39) target = $region21
    $region20: #{tpu_custom_call.1} parent=1 // pred_region
      %vm42 = vcmask 25600
      %43 = vst.msk [vmem:[#allocation2] sm:$0x3] %vm42, 0.0
    $region21: #{tpu_custom_call.1} parent=1 // pred_fallthru
      _
    %v44 = vld [vmem:[#allocation3] sm:$0xff]
    %v45 = vld [vmem:[#allocation3 + $0x8] sm:$0xff]
    %v46 = vld [vmem:[#allocation2] sm:$0x3]
    %v49 = vcombine.high %v44, %v44
    %v50 = vcombine.high %v45, %v45
    %vm53 = vcmask 1043456
    %v54 = vsel %vm53, %v44, 0.0
    %v55 = vsel %vm53, %v49, 0.0
    %v56 = vadd.f32 %v54, %v55
    %57 = vadd.xlane.f32.xlu0 %v56
    %v58 = vpop.xlane.xlu0 %57
    %v59 = vsel %vm53, %v45, 0.0
    %v60 = vsel %vm53, %v50, 0.0
    %v61 = vadd.f32 %v59, %v60
    %62 = vadd.xlane.f32.xlu0 %v61
    %v63 = vpop.xlane.xlu0 %62
    %v66 = vlaneseq
    %v67 = vand.u32 %v66, 127
    %v68 = vlaneseq
    %v69 = vshrl.u32 %v68, 7
    %v70 = vsub.s32 %v67, %v69
    %v71 = vrot.slane %v58, %v70
    %v72 = vlaneseq
    %v73 = vshrl.u32 %v72, 7
    %v74 = vsub.s32 %v67, %v73
    %v75 = vrot.slane %v63, %v74
    %vm76 = vcmask 1041409
    %v77 = vsel %vm76, %v75, %v71
    %v79 = vadd.f32 %v46, %v77
    %vm80 = vcmask 25600
    %81 = vst.msk [vmem:[#allocation2] sm:$0x3] %vm80, %v79
    // Predicated region
    $region22: #{tpu_custom_call.1} parent=1 // pred_check
      %p82 = pneg %p38
    $region23: #{tpu_custom_call.1} parent=1 // pred_check_branch
      %84 = sbr.rel (%p82) target = $region25
    $region24: #{tpu_custom_call.1} parent=1 // pred_region
      %v85 = vld [vmem:[#allocation2] sm:$0x3]
      %v86 = vmul.f32 %v85, 0.00390625
      %v87 = vld [vmem:[#allocation6] sm:$0xff]
      %v88 = vld [vmem:[#allocation6 + $0x8] sm:$0xff]
      %v89 = vld [vmem:[#allocation6 + $0x10] sm:$0xff]
      %v90 = vld [vmem:[#allocation6 + $0x18] sm:$0xff]
      %v91 = vld [vmem:[#allocation6 + $0x20] sm:$0xff]
      %v92 = vld [vmem:[#allocation6 + $0x28] sm:$0xff]
      %v93 = vld [vmem:[#allocation6 + $0x30] sm:$0xff]
      %v94 = vld [vmem:[#allocation6 + $0x38] sm:$0xff]
      %v95 = vld [vmem:[#allocation6 + $0x40] sm:$0xff]
      %v96 = vld [vmem:[#allocation6 + $0x48] sm:$0xff]
      %v97 = vld [vmem:[#allocation6 + $0x50] sm:$0xff]
      %v98 = vld [vmem:[#allocation6 + $0x58] sm:$0xff]
      %v99 = vld [vmem:[#allocation6 + $0x60] sm:$0xff]
      %v100 = vld [vmem:[#allocation6 + $0x68] sm:$0xff]
      %v101 = vld [vmem:[#allocation6 + $0x70] sm:$0xff]
      %v102 = vld [vmem:[#allocation6 + $0x78] sm:$0xff]
      %v103 = vld [vmem:[#allocation6 + $0x80] sm:$0xff]
      %v121 = vcombine.high %v87, %v87
      %v122 = vcombine.high %v88, %v88
      %v123 = vcombine.high %v89, %v89
      %v124 = vcombine.high %v90, %v90
      %v125 = vcombine.high %v91, %v91
      %v126 = vcombine.high %v92, %v92
      %v127 = vcombine.high %v93, %v93
      %v128 = vcombine.high %v94, %v94
      %v129 = vcombine.high %v95, %v95
      %v130 = vcombine.high %v96, %v96
      %v131 = vcombine.high %v97, %v97
      %v132 = vcombine.high %v98, %v98
      %v133 = vcombine.high %v99, %v99
      %v134 = vcombine.high %v100, %v100
      %v135 = vcombine.high %v101, %v101
      %v136 = vcombine.high %v102, %v102
      %v137 = vcombine.high %v103, %v103
      %vm138 = vcmask 31744
      %v140 = vsel %vm138, %v86, 0
      %v142 = vsel %vm53, %v87, 0
      %v144 = vsel %vm53, %v121, 0
      %v146 = vsel %vm53, %v88, 0
      %v148 = vsel %vm53, %v122, 0
      %v150 = vsel %vm53, %v89, 0
      %v152 = vsel %vm53, %v123, 0
      %v154 = vsel %vm53, %v90, 0
      %v156 = vsel %vm53, %v124, 0
      %v158 = vsel %vm53, %v91, 0
      %v160 = vsel %vm53, %v125, 0
      %v162 = vsel %vm53, %v92, 0
      %v164 = vsel %vm53, %v126, 0
      %v166 = vsel %vm53, %v93, 0
      %v168 = vsel %vm53, %v127, 0
      %v170 = vsel %vm53, %v94, 0
      %v172 = vsel %vm53, %v128, 0
      %v174 = vsel %vm53, %v95, 0
      %v176 = vsel %vm53, %v129, 0
      %v178 = vsel %vm53, %v96, 0
      %v180 = vsel %vm53, %v130, 0
      %v182 = vsel %vm53, %v97, 0
      %v184 = vsel %vm53, %v131, 0
      %v186 = vsel %vm53, %v98, 0
      %v188 = vsel %vm53, %v132, 0
      %v190 = vsel %vm53, %v99, 0
      %v192 = vsel %vm53, %v133, 0
      %v194 = vsel %vm53, %v100, 0
      %v196 = vsel %vm53, %v134, 0
      %v198 = vsel %vm53, %v101, 0
      %v200 = vsel %vm53, %v135, 0
      %v202 = vsel %vm53, %v102, 0
      %v204 = vsel %vm53, %v136, 0
      %v206 = vsel %vm53, %v103, 0
      %v208 = vsel %vm53, %v137, 0
      %210 = vmatprep.subr.mxu0 %v144
      %211 = vmatpush1.msra.mxu0 %v142
      %212 = vmatprep.subr.mxu0 0.0
      %213 = vmatpush1.msra.mxu0 0.0
      %214 = vmatprep.subr.mxu0 0.0
      %215 = vmatpush1.msra.mxu0 0.0
      %216 = vmatprep.subr.mxu0 0.0
      %217 = vmatpush1.msra.mxu0 0.0
      %218 = vmatprep.subr.mxu0 0.0
      %219 = vmatpush1.msra.mxu0 0.0
      %220 = vmatprep.subr.mxu0 0.0
      %221 = vmatpush1.msra.mxu0 0.0
      %222 = vmatprep.subr.mxu0 0.0
      %223 = vmatpush1.msra.mxu0 0.0
      %224 = vmatprep.subr.mxu0 0.0
      %225 = vmatpush1.msra.mxu0 0.0
      %226 = vmatprep.subr.mxu0 0.0
      %227 = vmatpush1.msra.mxu0 0.0
      %228 = vmatprep.subr.mxu0 0.0
      %229 = vmatpush1.msra.mxu0 0.0
      %230 = vmatprep.subr.mxu0 0.0
      %231 = vmatpush1.msra.mxu0 0.0
      %232 = vmatprep.subr.mxu0 0.0
      %233 = vmatpush1.msra.mxu0 0.0
      %234 = vmatprep.subr.mxu0 0.0
      %235 = vmatpush1.msra.mxu0 0.0
      %236 = vmatprep.subr.mxu0 0.0
      %237 = vmatpush1.msra.mxu0 0.0
      %238 = vmatprep.subr.mxu0 0.0
      %239 = vmatpush1.msra.mxu0 0.0
      %240 = vmatprep.subr.mxu0 0.0
      %241 = vmatpush1.msra.mxu0 0.0
      %242 = vmatprep.subr.mxu0 0.0
      %243 = vmatpush1.msra.mxu0 0.0
      %244 = vmatprep.subr.mxu0 0.0
      %245 = vmatpush1.msra.mxu0 0.0
      %246 = vmatprep.subr.mxu0 0.0
      %247 = vmatpush1.msra.mxu0 0.0
      %248 = vmatprep.subr.mxu0 0.0
      %249 = vmatpush1.msra.mxu0 0.0
      %250 = vmatprep.subr.mxu0 0.0
      %251 = vmatpush1.msra.mxu0 0.0
      %252 = vmatprep.subr.mxu0 0.0
      %253 = vmatpush1.msra.mxu0 0.0
      %254 = vmatprep.subr.mxu0 0.0
      %255 = vmatpush1.msra.mxu0 0.0
      %256 = vmatprep.subr.mxu0 0.0
      %257 = vmatpush1.msra.mxu0 0.0
      %258 = vmatprep.subr.mxu0 0.0
      %259 = vmatpush1.msra.mxu0 0.0
      %260 = vmatprep.subr.mxu0 0.0
      %261 = vmatpush1.msra.mxu0 0.0
      %262 = vmatprep.subr.mxu0 0.0
      %263 = vmatpush1.msra.mxu0 0.0
      %264 = vmatprep.subr.mxu0 0.0
      %265 = vmatpush1.msra.mxu0 0.0
      %266 = vmatprep.subr.mxu0 0.0
      %267 = vmatpush1.msra.mxu0 0.0
      %268 = vmatprep.subr.mxu0 0.0
      %269 = vmatpush1.msra.mxu0 0.0
      %270 = vmatprep.subr.mxu0 0.0
      %271 = vmatpush1.msra.mxu0 0.0
      %272 = vmatprep.subr.mxu0 0.0
      %273 = vmatpush1.msra.mxu0 0.0
      %274 = vmatprep.mubr.f32.mxu0 0.0
      %275 = vmatmul.mubr.f32.gmra.mrb[0].mxu0 %v140
      %v276 = vpop.f32.mrb[0].mxu0
      %v277 = vadd.f32 0.0, %v276
      %v278 = vpop.f32.mrb[0].mxu0
      %v279 = vadd.f32 0.0, %v278
      %280 = vdwg.mxu0
      %281 = vmatprep.subr.mxu0 %v148
      %282 = vmatpush1.msra.mxu0 %v146
      %283 = vmatprep.subr.mxu0 0.0
      %284 = vmatpush1.msra.mxu0 0.0
      %285 = vmatprep.subr.mxu0 0.0
      %286 = vmatpush1.msra.mxu0 0.0
      %287 = vmatprep.subr.mxu0 0.0
      %288 = vmatpush1.msra.mxu0 0.0
      %289 = vmatprep.subr.mxu0 0.0
      %290 = vmatpush1.msra.mxu0 0.0
      %291 = vmatprep.subr.mxu0 0.0
      %292 = vmatpush1.msra.mxu0 0.0
      %293 = vmatprep.subr.mxu0 0.0
      %294 = vmatpush1.msra.mxu0 0.0
      %295 = vmatprep.subr.mxu0 0.0
      %296 = vmatpush1.msra.mxu0 0.0
      %297 = vmatprep.subr.mxu0 0.0
      %298 = vmatpush1.msra.mxu0 0.0
      %299 = vmatprep.subr.mxu0 0.0
      %300 = vmatpush1.msra.mxu0 0.0
      %301 = vmatprep.subr.mxu0 0.0
      %302 = vmatpush1.msra.mxu0 0.0
      %303 = vmatprep.subr.mxu0 0.0
      %304 = vmatpush1.msra.mxu0 0.0
      %305 = vmatprep.subr.mxu0 0.0
      %306 = vmatpush1.msra.mxu0 0.0
      %307 = vmatprep.subr.mxu0 0.0
      %308 = vmatpush1.msra.mxu0 0.0
      %309 = vmatprep.subr.mxu0 0.0
      %310 = vmatpush1.msra.mxu0 0.0
      %311 = vmatprep.subr.mxu0 0.0
      %312 = vmatpush1.msra.mxu0 0.0
      %313 = vmatprep.subr.mxu0 0.0
      %314 = vmatpush1.msra.mxu0 0.0
      %315 = vmatprep.subr.mxu0 0.0
      %316 = vmatpush1.msra.mxu0 0.0
      %317 = vmatprep.subr.mxu0 0.0
      %318 = vmatpush1.msra.mxu0 0.0
      %319 = vmatprep.subr.mxu0 0.0
      %320 = vmatpush1.msra.mxu0 0.0
      %321 = vmatprep.subr.mxu0 0.0
      %322 = vmatpush1.msra.mxu0 0.0
      %323 = vmatprep.subr.mxu0 0.0
      %324 = vmatpush1.msra.mxu0 0.0
      %325 = vmatprep.subr.mxu0 0.0
      %326 = vmatpush1.msra.mxu0 0.0
      %327 = vmatprep.subr.mxu0 0.0
      %328 = vmatpush1.msra.mxu0 0.0
      %329 = vmatprep.subr.mxu0 0.0
      %330 = vmatpush1.msra.mxu0 0.0
      %331 = vmatprep.subr.mxu0 0.0
      %332 = vmatpush1.msra.mxu0 0.0
      %333 = vmatprep.subr.mxu0 0.0
      %334 = vmatpush1.msra.mxu0 0.0
      %335 = vmatprep.subr.mxu0 0.0
      %336 = vmatpush1.msra.mxu0 0.0
      %337 = vmatprep.subr.mxu0 0.0
      %338 = vmatpush1.msra.mxu0 0.0
      %339 = vmatprep.subr.mxu0 0.0
      %340 = vmatpush1.msra.mxu0 0.0
      %341 = vmatprep.subr.mxu0 0.0
      %342 = vmatpush1.msra.mxu0 0.0
      %343 = vmatprep.subr.mxu0 0.0
      %344 = vmatpush1.msra.mxu0 0.0
      %345 = vmatprep.mubr.f32.mxu0 0.0
      %346 = vmatmul.mubr.f32.gmra.mrb[0].mxu0 %v140
      %v347 = vpop.f32.mrb[0].mxu0
      %v348 = vadd.f32 0.0, %v347
      %v349 = vpop.f32.mrb[0].mxu0
      %v350 = vadd.f32 0.0, %v349
      %351 = vdwg.mxu0
      %352 = vmatprep.subr.mxu0 %v152
      %353 = vmatpush1.msra.mxu0 %v150
      %354 = vmatprep.subr.mxu0 0.0
      %355 = vmatpush1.msra.mxu0 0.0
      %356 = vmatprep.subr.mxu0 0.0
      %357 = vmatpush1.msra.mxu0 0.0
      %358 = vmatprep.subr.mxu0 0.0
      %359 = vmatpush1.msra.mxu0 0.0
      %360 = vmatprep.subr.mxu0 0.0
      %361 = vmatpush1.msra.mxu0 0.0
      %362 = vmatprep.subr.mxu0 0.0
      %363 = vmatpush1.msra.mxu0 0.0
      %364 = vmatprep.subr.mxu0 0.0
      %365 = vmatpush1.msra.mxu0 0.0
      %366 = vmatprep.subr.mxu0 0.0
      %367 = vmatpush1.msra.mxu0 0.0
      %368 = vmatprep.subr.mxu0 0.0
      %369 = vmatpush1.msra.mxu0 0.0
      %370 = vmatprep.subr.mxu0 0.0
      %371 = vmatpush1.msra.mxu0 0.0
      %372 = vmatprep.subr.mxu0 0.0
      %373 = vmatpush1.msra.mxu0 0.0
      %374 = vmatprep.subr.mxu0 0.0
      %375 = vmatpush1.msra.mxu0 0.0
      %376 = vmatprep.subr.mxu0 0.0
      %377 = vmatpush1.msra.mxu0 0.0
      %378 = vmatprep.subr.mxu0 0.0
      %379 = vmatpush1.msra.mxu0 0.0
      %380 = vmatprep.subr.mxu0 0.0
      %381 = vmatpush1.msra.mxu0 0.0
      %382 = vmatprep.subr.mxu0 0.0
      %383 = vmatpush1.msra.mxu0 0.0
      %384 = vmatprep.subr.mxu0 0.0
      %385 = vmatpush1.msra.mxu0 0.0
      %386 = vmatprep.subr.mxu0 0.0
      %387 = vmatpush1.msra.mxu0 0.0
      %388 = vmatprep.subr.mxu0 0.0
      %389 = vmatpush1.msra.mxu0 0.0
      %390 = vmatprep.subr.mxu0 0.0
      %391 = vmatpush1.msra.mxu0 0.0
      %392 = vmatprep.subr.mxu0 0.0
      %393 = vmatpush1.msra.mxu0 0.0
      %394 = vmatprep.subr.mxu0 0.0
      %395 = vmatpush1.msra.mxu0 0.0
      %396 = vmatprep.subr.mxu0 0.0
      %397 = vmatpush1.msra.mxu0 0.0
      %398 = vmatprep.subr.mxu0 0.0
      %399 = vmatpush1.msra.mxu0 0.0
      %400 = vmatprep.subr.mxu0 0.0
      %401 = vmatpush1.msra.mxu0 0.0
      %402 = vmatprep.subr.mxu0 0.0
      %403 = vmatpush1.msra.mxu0 0.0
      %404 = vmatprep.subr.mxu0 0.0
      %405 = vmatpush1.msra.mxu0 0.0
      %406 = vmatprep.subr.mxu0 0.0
      %407 = vmatpush1.msra.mxu0 0.0
      %408 = vmatprep.subr.mxu0 0.0
      %409 = vmatpush1.msra.mxu0 0.0
      %410 = vmatprep.subr.mxu0 0.0
      %411 = vmatpush1.msra.mxu0 0.0
      %412 = vmatprep.subr.mxu0 0.0
      %413 = vmatpush1.msra.mxu0 0.0
      %414 = vmatprep.subr.mxu0 0.0
      %415 = vmatpush1.msra.mxu0 0.0
      %416 = vmatprep.mubr.f32.mxu0 0.0
      %417 = vmatmul.mubr.f32.gmra.mrb[0].mxu0 %v140
      %v418 = vpop.f32.mrb[0].mxu0
      %v419 = vadd.f32 0.0, %v418
      %v420 = vpop.f32.mrb[0].mxu0
      %v421 = vadd.f32 0.0, %v420
      %422 = vdwg.mxu0
      %423 = vmatprep.subr.mxu0 %v156
      %424 = vmatpush1.msra.mxu0 %v154
      %425 = vmatprep.subr.mxu0 0.0
      %426 = vmatpush1.msra.mxu0 0.0
      %427 = vmatprep.subr.mxu0 0.0
      %428 = vmatpush1.msra.mxu0 0.0
      %429 = vmatprep.subr.mxu0 0.0
      %430 = vmatpush1.msra.mxu0 0.0
      %431 = vmatprep.subr.mxu0 0.0
      %432 = vmatpush1.msra.mxu0 0.0
      %433 = vmatprep.subr.mxu0 0.0
      %434 = vmatpush1.msra.mxu0 0.0
      %435 = vmatprep.subr.mxu0 0.0
      %436 = vmatpush1.msra.mxu0 0.0
      %437 = vmatprep.subr.mxu0 0.0
      %438 = vmatpush1.msra.mxu0 0.0
      %439 = vmatprep.subr.mxu0 0.0
      %440 = vmatpush1.msra.mxu0 0.0
      %441 = vmatprep.subr.mxu0 0.0
      %442 = vmatpush1.msra.mxu0 0.0
      %443 = vmatprep.subr.mxu0 0.0
      %444 = vmatpush1.msra.mxu0 0.0
      %445 = vmatprep.subr.mxu0 0.0
      %446 = vmatpush1.msra.mxu0 0.0
      %447 = vmatprep.subr.mxu0 0.0
      %448 = vmatpush1.msra.mxu0 0.0
      %449 = vmatprep.subr.mxu0 0.0
      %450 = vmatpush1.msra.mxu0 0.0
      %451 = vmatprep.subr.mxu0 0.0
      %452 = vmatpush1.msra.mxu0 0.0
      %453 = vmatprep.subr.mxu0 0.0
      %454 = vmatpush1.msra.mxu0 0.0
      %455 = vmatprep.subr.mxu0 0.0
      %456 = vmatpush1.msra.mxu0 0.0
      %457 = vmatprep.subr.mxu0 0.0
      %458 = vmatpush1.msra.mxu0 0.0
      %459 = vmatprep.subr.mxu0 0.0
      %460 = vmatpush1.msra.mxu0 0.0
      %461 = vmatprep.subr.mxu0 0.0
      %462 = vmatpush1.msra.mxu0 0.0
      %463 = vmatprep.subr.mxu0 0.0
      %464 = vmatpush1.msra.mxu0 0.0
      %465 = vmatprep.subr.mxu0 0.0
      %466 = vmatpush1.msra.mxu0 0.0
      %467 = vmatprep.subr.mxu0 0.0
      %468 = vmatpush1.msra.mxu0 0.0
      %469 = vmatprep.subr.mxu0 0.0
      %470 = vmatpush1.msra.mxu0 0.0
      %471 = vmatprep.subr.mxu0 0.0
      %472 = vmatpush1.msra.mxu0 0.0
      %473 = vmatprep.subr.mxu0 0.0
      %474 = vmatpush1.msra.mxu0 0.0
      %475 = vmatprep.subr.mxu0 0.0
      %476 = vmatpush1.msra.mxu0 0.0
      %477 = vmatprep.subr.mxu0 0.0
      %478 = vmatpush1.msra.mxu0 0.0
      %479 = vmatprep.subr.mxu0 0.0
      %480 = vmatpush1.msra.mxu0 0.0
      %481 = vmatprep.subr.mxu0 0.0
      %482 = vmatpush1.msra.mxu0 0.0
      %483 = vmatprep.subr.mxu0 0.0
      %484 = vmatpush1.msra.mxu0 0.0
      %485 = vmatprep.subr.mxu0 0.0
      %486 = vmatpush1.msra.mxu0 0.0
      %487 = vmatprep.mubr.f32.mxu0 0.0
      %488 = vmatmul.mubr.f32.gmra.mrb[0].mxu0 %v140
      %v489 = vpop.f32.mrb[0].mxu0
      %v490 = vadd.f32 0.0, %v489
      %v491 = vpop.f32.mrb[0].mxu0
      %v492 = vadd.f32 0.0, %v491
      %493 = vdwg.mxu0
      %494 = vmatprep.subr.mxu0 %v160
      %495 = vmatpush1.msra.mxu0 %v158
      %496 = vmatprep.subr.mxu0 0.0
      %497 = vmatpush1.msra.mxu0 0.0
      %498 = vmatprep.subr.mxu0 0.0
      %499 = vmatpush1.msra.mxu0 0.0
      %500 = vmatprep.subr.mxu0 0.0
      %501 = vmatpush1.msra.mxu0 0.0
      %502 = vmatprep.subr.mxu0 0.0
      %503 = vmatpush1.msra.mxu0 0.0
      %504 = vmatprep.subr.mxu0 0.0
      %505 = vmatpush1.msra.mxu0 0.0
      %506 = vmatprep.subr.mxu0 0.0
      %507 = vmatpush1.msra.mxu0 0.0
      %508 = vmatprep.subr.mxu0 0.0
      %509 = vmatpush1.msra.mxu0 0.0
      %510 = vmatprep.subr.mxu0 0.0
      %511 = vmatpush1.msra.mxu0 0.0
      %512 = vmatprep.subr.mxu0 0.0
      %513 = vmatpush1.msra.mxu0 0.0
      %514 = vmatprep.subr.mxu0 0.0
      %515 = vmatpush1.msra.mxu0 0.0
      %516 = vmatprep.subr.mxu0 0.0
      %517 = vmatpush1.msra.mxu0 0.0
      %518 = vmatprep.subr.mxu0 0.0
      %519 = vmatpush1.msra.mxu0 0.0
      %520 = vmatprep.subr.mxu0 0.0
      %521 = vmatpush1.msra.mxu0 0.0
      %522 = vmatprep.subr.mxu0 0.0
      %523 = vmatpush1.msra.mxu0 0.0
      %524 = vmatprep.subr.mxu0 0.0
      %525 = vmatpush1.msra.mxu0 0.0
      %526 = vmatprep.subr.mxu0 0.0
      %527 = vmatpush1.msra.mxu0 0.0
      %528 = vmatprep.subr.mxu0 0.0
      %529 = vmatpush1.msra.mxu0 0.0
      %530 = vmatprep.subr.mxu0 0.0
      %531 = vmatpush1.msra.mxu0 0.0
      %532 = vmatprep.subr.mxu0 0.0
      %533 = vmatpush1.msra.mxu0 0.0
      %534 = vmatprep.subr.mxu0 0.0
      %535 = vmatpush1.msra.mxu0 0.0
      %536 = vmatprep.subr.mxu0 0.0
      %537 = vmatpush1.msra.mxu0 0.0
      %538 = vmatprep.subr.mxu0 0.0
      %539 = vmatpush1.msra.mxu0 0.0
      %540 = vmatprep.subr.mxu0 0.0
      %541 = vmatpush1.msra.mxu0 0.0
      %542 = vmatprep.subr.mxu0 0.0
      %543 = vmatpush1.msra.mxu0 0.0
      %544 = vmatprep.subr.mxu0 0.0
      %545 = vmatpush1.msra.mxu0 0.0
      %546 = vmatprep.subr.mxu0 0.0
      %547 = vmatpush1.msra.mxu0 0.0
      %548 = vmatprep.subr.mxu0 0.0
      %549 = vmatpush1.msra.mxu0 0.0
      %550 = vmatprep.subr.mxu0 0.0
      %551 = vmatpush1.msra.mxu0 0.0
      %552 = vmatprep.subr.mxu0 0.0
      %553 = vmatpush1.msra.mxu0 0.0
      %554 = vmatprep.subr.mxu0 0.0
      %555 = vmatpush1.msra.mxu0 0.0
      %556 = vmatprep.subr.mxu0 0.0
      %557 = vmatpush1.msra.mxu0 0.0
      %558 = vmatprep.mubr.f32.mxu0 0.0
      %559 = vmatmul.mubr.f32.gmra.mrb[0].mxu0 %v140
      %v560 = vpop.f32.mrb[0].mxu0
      %v561 = vadd.f32 0.0, %v560
      %v562 = vpop.f32.mrb[0].mxu0
      %v563 = vadd.f32 0.0, %v562
      %564 = vdwg.mxu0
      %565 = vmatprep.subr.mxu0 %v164
      %566 = vmatpush1.msra.mxu0 %v162
      %567 = vmatprep.subr.mxu0 0.0
      %568 = vmatpush1.msra.mxu0 0.0
      %569 = vmatprep.subr.mxu0 0.0
      %570 = vmatpush1.msra.mxu0 0.0
      %571 = vmatprep.subr.mxu0 0.0
      %572 = vmatpush1.msra.mxu0 0.0
      %573 = vmatprep.subr.mxu0 0.0
      %574 = vmatpush1.msra.mxu0 0.0
      %575 = vmatprep.subr.mxu0 0.0
      %576 = vmatpush1.msra.mxu0 0.0
      %577 = vmatprep.subr.mxu0 0.0
      %578 = vmatpush1.msra.mxu0 0.0
      %579 = vmatprep.subr.mxu0 0.0
      %580 = vmatpush1.msra.mxu0 0.0
      %581 = vmatprep.subr.mxu0 0.0
      %582 = vmatpush1.msra.mxu0 0.0
      %583 = vmatprep.subr.mxu0 0.0
      %584 = vmatpush1.msra.mxu0 0.0
      %585 = vmatprep.subr.mxu0 0.0
      %586 = vmatpush1.msra.mxu0 0.0
      %587 = vmatprep.subr.mxu0 0.0
      %588 = vmatpush1.msra.mxu0 0.0
      %589 = vmatprep.subr.mxu0 0.0
      %590 = vmatpush1.msra.mxu0 0.0
      %591 = vmatprep.subr.mxu0 0.0
      %592 = vmatpush1.msra.mxu0 0.0
      %593 = vmatprep.subr.mxu0 0.0
      %594 = vmatpush1.msra.mxu0 0.0
      %595 = vmatprep.subr.mxu0 0.0
      %596 = vmatpush1.msra.mxu0 0.0
      %597 = vmatprep.subr.mxu0 0.0
      %598 = vmatpush1.msra.mxu0 0.0
      %599 = vmatprep.subr.mxu0 0.0
      %600 = vmatpush1.msra.mxu0 0.0
      %601 = vmatprep.subr.mxu0 0.0
      %602 = vmatpush1.msra.mxu0 0.0
      %603 = vmatprep.subr.mxu0 0.0
      %604 = vmatpush1.msra.mxu0 0.0
      %605 = vmatprep.subr.mxu0 0.0
      %606 = vmatpush1.msra.mxu0 0.0
      %607 = vmatprep.subr.mxu0 0.0
      %608 = vmatpush1.msra.mxu0 0.0
      %609 = vmatprep.subr.mxu0 0.0
      %610 = vmatpush1.msra.mxu0 0.0
      %611 = vmatprep.subr.mxu0 0.0
      %612 = vmatpush1.msra.mxu0 0.0
      %613 = vmatprep.subr.mxu0 0.0
      %614 = vmatpush1.msra.mxu0 0.0
      %615 = vmatprep.subr.mxu0 0.0
      %616 = vmatpush1.msra.mxu0 0.0
      %617 = vmatprep.subr.mxu0 0.0
      %618 = vmatpush1.msra.mxu0 0.0
      %619 = vmatprep.subr.mxu0 0.0
      %620 = vmatpush1.msra.mxu0 0.0
      %621 = vmatprep.subr.mxu0 0.0
      %622 = vmatpush1.msra.mxu0 0.0
      %623 = vmatprep.subr.mxu0 0.0
      %624 = vmatpush1.msra.mxu0 0.0
      %625 = vmatprep.subr.mxu0 0.0
      %626 = vmatpush1.msra.mxu0 0.0
      %627 = vmatprep.subr.mxu0 0.0
      %628 = vmatpush1.msra.mxu0 0.0
      %629 = vmatprep.mubr.f32.mxu0 0.0
      %630 = vmatmul.mubr.f32.gmra.mrb[0].mxu0 %v140
      %v631 = vpop.f32.mrb[0].mxu0
      %v632 = vadd.f32 0.0, %v631
      %v633 = vpop.f32.mrb[0].mxu0
      %v634 = vadd.f32 0.0, %v633
      %635 = vdwg.mxu0
      %636 = vmatprep.subr.mxu0 %v168
      %637 = vmatpush1.msra.mxu0 %v166
      %638 = vmatprep.subr.mxu0 0.0
      %639 = vmatpush1.msra.mxu0 0.0
      %640 = vmatprep.subr.mxu0 0.0
      %641 = vmatpush1.msra.mxu0 0.0
      %642 = vmatprep.subr.mxu0 0.0
      %643 = vmatpush1.msra.mxu0 0.0
      %644 = vmatprep.subr.mxu0 0.0
      %645 = vmatpush1.msra.mxu0 0.0
      %646 = vmatprep.subr.mxu0 0.0
      %647 = vmatpush1.msra.mxu0 0.0
      %648 = vmatprep.subr.mxu0 0.0
      %649 = vmatpush1.msra.mxu0 0.0
      %650 = vmatprep.subr.mxu0 0.0
      %651 = vmatpush1.msra.mxu0 0.0
      %652 = vmatprep.subr.mxu0 0.0
      %653 = vmatpush1.msra.mxu0 0.0
      %654 = vmatprep.subr.mxu0 0.0
      %655 = vmatpush1.msra.mxu0 0.0
      %656 = vmatprep.subr.mxu0 0.0
      %657 = vmatpush1.msra.mxu0 0.0
      %658 = vmatprep.subr.mxu0 0.0
      %659 = vmatpush1.msra.mxu0 0.0
      %660 = vmatprep.subr.mxu0 0.0
      %661 = vmatpush1.msra.mxu0 0.0
      %662 = vmatprep.subr.mxu0 0.0
      %663 = vmatpush1.msra.mxu0 0.0
      %664 = vmatprep.subr.mxu0 0.0
      %665 = vmatpush1.msra.mxu0 0.0
      %666 = vmatprep.subr.mxu0 0.0
      %667 = vmatpush1.msra.mxu0 0.0
      %668 = vmatprep.subr.mxu0 0.0
      %669 = vmatpush1.msra.mxu0 0.0
      %670 = vmatprep.subr.mxu0 0.0
      %671 = vmatpush1.msra.mxu0 0.0
      %672 = vmatprep.subr.mxu0 0.0
      %673 = vmatpush1.msra.mxu0 0.0
      %674 = vmatprep.subr.mxu0 0.0
      %675 = vmatpush1.msra.mxu0 0.0
      %676 = vmatprep.subr.mxu0 0.0
      %677 = vmatpush1.msra.mxu0 0.0
      %678 = vmatprep.subr.mxu0 0.0
      %679 = vmatpush1.msra.mxu0 0.0
      %680 = vmatprep.subr.mxu0 0.0
      %681 = vmatpush1.msra.mxu0 0.0
      %682 = vmatprep.subr.mxu0 0.0
      %683 = vmatpush1.msra.mxu0 0.0
      %684 = vmatprep.subr.mxu0 0.0
      %685 = vmatpush1.msra.mxu0 0.0
      %686 = vmatprep.subr.mxu0 0.0
      %687 = vmatpush1.msra.mxu0 0.0
      %688 = vmatprep.subr.mxu0 0.0
      %689 = vmatpush1.msra.mxu0 0.0
      %690 = vmatprep.subr.mxu0 0.0
      %691 = vmatpush1.msra.mxu0 0.0
      %692 = vmatprep.subr.mxu0 0.0
      %693 = vmatpush1.msra.mxu0 0.0
      %694 = vmatprep.subr.mxu0 0.0
      %695 = vmatpush1.msra.mxu0 0.0
      %696 = vmatprep.subr.mxu0 0.0
      %697 = vmatpush1.msra.mxu0 0.0
      %698 = vmatprep.subr.mxu0 0.0
      %699 = vmatpush1.msra.mxu0 0.0
      %700 = vmatprep.mubr.f32.mxu0 0.0
      %701 = vmatmul.mubr.f32.gmra.mrb[0].mxu0 %v140
      %v702 = vpop.f32.mrb[0].mxu0
      %v703 = vadd.f32 0.0, %v702
      %v704 = vpop.f32.mrb[0].mxu0
      %v705 = vadd.f32 0.0, %v704
      %706 = vdwg.mxu0
      %707 = vmatprep.subr.mxu0 %v172
      %708 = vmatpush1.msra.mxu0 %v170
      %709 = vmatprep.subr.mxu0 0.0
      %710 = vmatpush1.msra.mxu0 0.0
      %711 = vmatprep.subr.mxu0 0.0
      %712 = vmatpush1.msra.mxu0 0.0
      %713 = vmatprep.subr.mxu0 0.0
      %714 = vmatpush1.msra.mxu0 0.0
      %715 = vmatprep.subr.mxu0 0.0
      %716 = vmatpush1.msra.mxu0 0.0
      %717 = vmatprep.subr.mxu0 0.0
      %718 = vmatpush1.msra.mxu0 0.0
      %719 = vmatprep.subr.mxu0 0.0
      %720 = vmatpush1.msra.mxu0 0.0
      %721 = vmatprep.subr.mxu0 0.0
      %722 = vmatpush1.msra.mxu0 0.0
      %723 = vmatprep.subr.mxu0 0.0
      %724 = vmatpush1.msra.mxu0 0.0
      %725 = vmatprep.subr.mxu0 0.0
      %726 = vmatpush1.msra.mxu0 0.0
      %727 = vmatprep.subr.mxu0 0.0
      %728 = vmatpush1.msra.mxu0 0.0
      %729 = vmatprep.subr.mxu0 0.0
      %730 = vmatpush1.msra.mxu0 0.0
      %731 = vmatprep.subr.mxu0 0.0
      %732 = vmatpush1.msra.mxu0 0.0
      %733 = vmatprep.subr.mxu0 0.0
      %734 = vmatpush1.msra.mxu0 0.0
      %735 = vmatprep.subr.mxu0 0.0
      %736 = vmatpush1.msra.mxu0 0.0
      %737 = vmatprep.subr.mxu0 0.0
      %738 = vmatpush1.msra.mxu0 0.0
      %739 = vmatprep.subr.mxu0 0.0
      %740 = vmatpush1.msra.mxu0 0.0
      %741 = vmatprep.subr.mxu0 0.0
      %742 = vmatpush1.msra.mxu0 0.0
      %743 = vmatprep.subr.mxu0 0.0
      %744 = vmatpush1.msra.mxu0 0.0
      %745 = vmatprep.subr.mxu0 0.0
      %746 = vmatpush1.msra.mxu0 0.0
      %747 = vmatprep.subr.mxu0 0.0
      %748 = vmatpush1.msra.mxu0 0.0
      %749 = vmatprep.subr.mxu0 0.0
      %750 = vmatpush1.msra.mxu0 0.0
      %751 = vmatprep.subr.mxu0 0.0
      %752 = vmatpush1.msra.mxu0 0.0
      %753 = vmatprep.subr.mxu0 0.0
      %754 = vmatpush1.msra.mxu0 0.0
      %755 = vmatprep.subr.mxu0 0.0
      %756 = vmatpush1.msra.mxu0 0.0
      %757 = vmatprep.subr.mxu0 0.0
      %758 = vmatpush1.msra.mxu0 0.0
      %759 = vmatprep.subr.mxu0 0.0
      %760 = vmatpush1.msra.mxu0 0.0
      %761 = vmatprep.subr.mxu0 0.0
      %762 = vmatpush1.msra.mxu0 0.0
      %763 = vmatprep.subr.mxu0 0.0
      %764 = vmatpush1.msra.mxu0 0.0
      %765 = vmatprep.subr.mxu0 0.0
      %766 = vmatpush1.msra.mxu0 0.0
      %767 = vmatprep.subr.mxu0 0.0
      %768 = vmatpush1.msra.mxu0 0.0
      %769 = vmatprep.subr.mxu0 0.0
      %770 = vmatpush1.msra.mxu0 0.0
      %771 = vmatprep.mubr.f32.mxu0 0.0
      %772 = vmatmul.mubr.f32.gmra.mrb[0].mxu0 %v140
      %v773 = vpop.f32.mrb[0].mxu0
      %v774 = vadd.f32 0.0, %v773
      %v775 = vpop.f32.mrb[0].mxu0
      %v776 = vadd.f32 0.0, %v775
      %777 = vdwg.mxu0
      %778 = vmatprep.subr.mxu0 %v176
      %779 = vmatpush1.msra.mxu0 %v174
      %780 = vmatprep.subr.mxu0 0.0
      %781 = vmatpush1.msra.mxu0 0.0
      %782 = vmatprep.subr.mxu0 0.0
      %783 = vmatpush1.msra.mxu0 0.0
      %784 = vmatprep.subr.mxu0 0.0
      %785 = vmatpush1.msra.mxu0 0.0
      %786 = vmatprep.subr.mxu0 0.0
      %787 = vmatpush1.msra.mxu0 0.0
      %788 = vmatprep.subr.mxu0 0.0
      %789 = vmatpush1.msra.mxu0 0.0
      %790 = vmatprep.subr.mxu0 0.0
      %791 = vmatpush1.msra.mxu0 0.0
      %792 = vmatprep.subr.mxu0 0.0
      %793 = vmatpush1.msra.mxu0 0.0
      %794 = vmatprep.subr.mxu0 0.0
      %795 = vmatpush1.msra.mxu0 0.0
      %796 = vmatprep.subr.mxu0 0.0
      %797 = vmatpush1.msra.mxu0 0.0
      %798 = vmatprep.subr.mxu0 0.0
      %799 = vmatpush1.msra.mxu0 0.0
      %800 = vmatprep.subr.mxu0 0.0
      %801 = vmatpush1.msra.mxu0 0.0
      %802 = vmatprep.subr.mxu0 0.0
      %803 = vmatpush1.msra.mxu0 0.0
      %804 = vmatprep.subr.mxu0 0.0
      %805 = vmatpush1.msra.mxu0 0.0
      %806 = vmatprep.subr.mxu0 0.0
      %807 = vmatpush1.msra.mxu0 0.0
      %808 = vmatprep.subr.mxu0 0.0
      %809 = vmatpush1.msra.mxu0 0.0
      %810 = vmatprep.subr.mxu0 0.0
      %811 = vmatpush1.msra.mxu0 0.0
      %812 = vmatprep.subr.mxu0 0.0
      %813 = vmatpush1.msra.mxu0 0.0
      %814 = vmatprep.subr.mxu0 0.0
      %815 = vmatpush1.msra.mxu0 0.0
      %816 = vmatprep.subr.mxu0 0.0
      %817 = vmatpush1.msra.mxu0 0.0
      %818 = vmatprep.subr.mxu0 0.0
      %819 = vmatpush1.msra.mxu0 0.0
      %820 = vmatprep.subr.mxu0 0.0
      %821 = vmatpush1.msra.mxu0 0.0
      %822 = vmatprep.subr.mxu0 0.0
      %823 = vmatpush1.msra.mxu0 0.0
      %824 = vmatprep.subr.mxu0 0.0
      %825 = vmatpush1.msra.mxu0 0.0
      %826 = vmatprep.subr.mxu0 0.0
      %827 = vmatpush1.msra.mxu0 0.0
      %828 = vmatprep.subr.mxu0 0.0
      %829 = vmatpush1.msra.mxu0 0.0
      %830 = vmatprep.subr.mxu0 0.0
      %831 = vmatpush1.msra.mxu0 0.0
      %832 = vmatprep.subr.mxu0 0.0
      %833 = vmatpush1.msra.mxu0 0.0
      %834 = vmatprep.subr.mxu0 0.0
      %835 = vmatpush1.msra.mxu0 0.0
      %836 = vmatprep.subr.mxu0 0.0
      %837 = vmatpush1.msra.mxu0 0.0
      %838 = vmatprep.subr.mxu0 0.0
      %839 = vmatpush1.msra.mxu0 0.0
      %840 = vmatprep.subr.mxu0 0.0
      %841 = vmatpush1.msra.mxu0 0.0
      %842 = vmatprep.mubr.f32.mxu0 0.0
      %843 = vmatmul.mubr.f32.gmra.mrb[0].mxu0 %v140
      %v844 = vpop.f32.mrb[0].mxu0
      %v845 = vadd.f32 0.0, %v844
      %v846 = vpop.f32.mrb[0].mxu0
      %v847 = vadd.f32 0.0, %v846
      %848 = vdwg.mxu0
      %849 = vmatprep.subr.mxu0 %v180
      %850 = vmatpush1.msra.mxu0 %v178
      %851 = vmatprep.subr.mxu0 0.0
      %852 = vmatpush1.msra.mxu0 0.0
      %853 = vmatprep.subr.mxu0 0.0
      %854 = vmatpush1.msra.mxu0 0.0
      %855 = vmatprep.subr.mxu0 0.0
      %856 = vmatpush1.msra.mxu0 0.0
      %857 = vmatprep.subr.mxu0 0.0
      %858 = vmatpush1.msra.mxu0 0.0
      %859 = vmatprep.subr.mxu0 0.0
      %860 = vmatpush1.msra.mxu0 0.0
      %861 = vmatprep.subr.mxu0 0.0
      %862 = vmatpush1.msra.mxu0 0.0
      %863 = vmatprep.subr.mxu0 0.0
      %864 = vmatpush1.msra.mxu0 0.0
      %865 = vmatprep.subr.mxu0 0.0
      %866 = vmatpush1.msra.mxu0 0.0
      %867 = vmatprep.subr.mxu0 0.0
      %868 = vmatpush1.msra.mxu0 0.0
      %869 = vmatprep.subr.mxu0 0.0
      %870 = vmatpush1.msra.mxu0 0.0
      %871 = vmatprep.subr.mxu0 0.0
      %872 = vmatpush1.msra.mxu0 0.0
      %873 = vmatprep.subr.mxu0 0.0
      %874 = vmatpush1.msra.mxu0 0.0
      %875 = vmatprep.subr.mxu0 0.0
      %876 = vmatpush1.msra.mxu0 0.0
      %877 = vmatprep.subr.mxu0 0.0
      %878 = vmatpush1.msra.mxu0 0.0
      %879 = vmatprep.subr.mxu0 0.0
      %880 = vmatpush1.msra.mxu0 0.0
      %881 = vmatprep.subr.mxu0 0.0
      %882 = vmatpush1.msra.mxu0 0.0
      %883 = vmatprep.subr.mxu0 0.0
      %884 = vmatpush1.msra.mxu0 0.0
      %885 = vmatprep.subr.mxu0 0.0
      %886 = vmatpush1.msra.mxu0 0.0
      %887 = vmatprep.subr.mxu0 0.0
      %888 = vmatpush1.msra.mxu0 0.0
      %889 = vmatprep.subr.mxu0 0.0
      %890 = vmatpush1.msra.mxu0 0.0
      %891 = vmatprep.subr.mxu0 0.0
      %892 = vmatpush1.msra.mxu0 0.0
      %893 = vmatprep.subr.mxu0 0.0
      %894 = vmatpush1.msra.mxu0 0.0
      %895 = vmatprep.subr.mxu0 0.0
      %896 = vmatpush1.msra.mxu0 0.0
      %897 = vmatprep.subr.mxu0 0.0
      %898 = vmatpush1.msra.mxu0 0.0
      %899 = vmatprep.subr.mxu0 0.0
      %900 = vmatpush1.msra.mxu0 0.0
      %901 = vmatprep.subr.mxu0 0.0
      %902 = vmatpush1.msra.mxu0 0.0
      %903 = vmatprep.subr.mxu0 0.0
      %904 = vmatpush1.msra.mxu0 0.0
      %905 = vmatprep.subr.mxu0 0.0
      %906 = vmatpush1.msra.mxu0 0.0
      %907 = vmatprep.subr.mxu0 0.0
      %908 = vmatpush1.msra.mxu0 0.0
      %909 = vmatprep.subr.mxu0 0.0
      %910 = vmatpush1.msra.mxu0 0.0
      %911 = vmatprep.subr.mxu0 0.0
      %912 = vmatpush1.msra.mxu0 0.0
      %913 = vmatprep.mubr.f32.mxu0 0.0
      %914 = vmatmul.mubr.f32.gmra.mrb[0].mxu0 %v140
      %v915 = vpop.f32.mrb[0].mxu0
      %v916 = vadd.f32 0.0, %v915
      %v917 = vpop.f32.mrb[0].mxu0
      %v918 = vadd.f32 0.0, %v917
      %919 = vdwg.mxu0
      %920 = vmatprep.subr.mxu0 %v184
      %921 = vmatpush1.msra.mxu0 %v182
      %922 = vmatprep.subr.mxu0 0.0
      %923 = vmatpush1.msra.mxu0 0.0
      %924 = vmatprep.subr.mxu0 0.0
      %925 = vmatpush1.msra.mxu0 0.0
      %926 = vmatprep.subr.mxu0 0.0
      %927 = vmatpush1.msra.mxu0 0.0
      %928 = vmatprep.subr.mxu0 0.0
      %929 = vmatpush1.msra.mxu0 0.0
      %930 = vmatprep.subr.mxu0 0.0
      %931 = vmatpush1.msra.mxu0 0.0
      %932 = vmatprep.subr.mxu0 0.0
      %933 = vmatpush1.msra.mxu0 0.0
      %934 = vmatprep.subr.mxu0 0.0
      %935 = vmatpush1.msra.mxu0 0.0
      %936 = vmatprep.subr.mxu0 0.0
      %937 = vmatpush1.msra.mxu0 0.0
      %938 = vmatprep.subr.mxu0 0.0
      %939 = vmatpush1.msra.mxu0 0.0
      %940 = vmatprep.subr.mxu0 0.0
      %941 = vmatpush1.msra.mxu0 0.0
      %942 = vmatprep.subr.mxu0 0.0
      %943 = vmatpush1.msra.mxu0 0.0
      %944 = vmatprep.subr.mxu0 0.0
      %945 = vmatpush1.msra.mxu0 0.0
      %946 = vmatprep.subr.mxu0 0.0
      %947 = vmatpush1.msra.mxu0 0.0
      %948 = vmatprep.subr.mxu0 0.0
      %949 = vmatpush1.msra.mxu0 0.0
      %950 = vmatprep.subr.mxu0 0.0
      %951 = vmatpush1.msra.mxu0 0.0
      %952 = vmatprep.subr.mxu0 0.0
      %953 = vmatpush1.msra.mxu0 0.0
      %954 = vmatprep.subr.mxu0 0.0
      %955 = vmatpush1.msra.mxu0 0.0
      %956 = vmatprep.subr.mxu0 0.0
      %957 = vmatpush1.msra.mxu0 0.0
      %958 = vmatprep.subr.mxu0 0.0
      %959 = vmatpush1.msra.mxu0 0.0
      %960 = vmatprep.subr.mxu0 0.0
      %961 = vmatpush1.msra.mxu0 0.0
      %962 = vmatprep.subr.mxu0 0.0
      %963 = vmatpush1.msra.mxu0 0.0
      %964 = vmatprep.subr.mxu0 0.0
      %965 = vmatpush1.msra.mxu0 0.0
      %966 = vmatprep.subr.mxu0 0.0
      %967 = vmatpush1.msra.mxu0 0.0
      %968 = vmatprep.subr.mxu0 0.0
      %969 = vmatpush1.msra.mxu0 0.0
      %970 = vmatprep.subr.mxu0 0.0
      %971 = vmatpush1.msra.mxu0 0.0
      %972 = vmatprep.subr.mxu0 0.0
      %973 = vmatpush1.msra.mxu0 0.0
      %974 = vmatprep.subr.mxu0 0.0
      %975 = vmatpush1.msra.mxu0 0.0
      %976 = vmatprep.subr.mxu0 0.0
      %977 = vmatpush1.msra.mxu0 0.0
      %978 = vmatprep.subr.mxu0 0.0
      %979 = vmatpush1.msra.mxu0 0.0
      %980 = vmatprep.subr.mxu0 0.0
      %981 = vmatpush1.msra.mxu0 0.0
      %982 = vmatprep.subr.mxu0 0.0
      %983 = vmatpush1.msra.mxu0 0.0
      %984 = vmatprep.mubr.f32.mxu0 0.0
      %985 = vmatmul.mubr.f32.gmra.mrb[0].mxu0 %v140
      %v986 = vpop.f32.mrb[0].mxu0
      %v987 = vadd.f32 0.0, %v986
      %v988 = vpop.f32.mrb[0].mxu0
      %v989 = vadd.f32 0.0, %v988
      %990 = vdwg.mxu0
      %991 = vmatprep.subr.mxu0 %v188
      %992 = vmatpush1.msra.mxu0 %v186
      %993 = vmatprep.subr.mxu0 0.0
      %994 = vmatpush1.msra.mxu0 0.0
      %995 = vmatprep.subr.mxu0 0.0
      %996 = vmatpush1.msra.mxu0 0.0
      %997 = vmatprep.subr.mxu0 0.0
      %998 = vmatpush1.msra.mxu0 0.0
      %999 = vmatprep.subr.mxu0 0.0
      %1000 = vmatpush1.msra.mxu0 0.0
      %1001 = vmatprep.subr.mxu0 0.0
      %1002 = vmatpush1.msra.mxu0 0.0
      %1003 = vmatprep.subr.mxu0 0.0
      %1004 = vmatpush1.msra.mxu0 0.0
      %1005 = vmatprep.subr.mxu0 0.0
      %1006 = vmatpush1.msra.mxu0 0.0
      %1007 = vmatprep.subr.mxu0 0.0
      %1008 = vmatpush1.msra.mxu0 0.0
      %1009 = vmatprep.subr.mxu0 0.0
      %1010 = vmatpush1.msra.mxu0 0.0
      %1011 = vmatprep.subr.mxu0 0.0
      %1012 = vmatpush1.msra.mxu0 0.0
      %1013 = vmatprep.subr.mxu0 0.0
      %1014 = vmatpush1.msra.mxu0 0.0
      %1015 = vmatprep.subr.mxu0 0.0
      %1016 = vmatpush1.msra.mxu0 0.0
      %1017 = vmatprep.subr.mxu0 0.0
      %1018 = vmatpush1.msra.mxu0 0.0
      %1019 = vmatprep.subr.mxu0 0.0
      %1020 = vmatpush1.msra.mxu0 0.0
      %1021 = vmatprep.subr.mxu0 0.0
      %1022 = vmatpush1.msra.mxu0 0.0
      %1023 = vmatprep.subr.mxu0 0.0
      %1024 = vmatpush1.msra.mxu0 0.0
      %1025 = vmatprep.subr.mxu0 0.0
      %1026 = vmatpush1.msra.mxu0 0.0
      %1027 = vmatprep.subr.mxu0 0.0
      %1028 = vmatpush1.msra.mxu0 0.0
      %1029 = vmatprep.subr.mxu0 0.0
      %1030 = vmatpush1.msra.mxu0 0.0
      %1031 = vmatprep.subr.mxu0 0.0
      %1032 = vmatpush1.msra.mxu0 0.0
      %1033 = vmatprep.subr.mxu0 0.0
      %1034 = vmatpush1.msra.mxu0 0.0
      %1035 = vmatprep.subr.mxu0 0.0
      %1036 = vmatpush1.msra.mxu0 0.0
      %1037 = vmatprep.subr.mxu0 0.0
      %1038 = vmatpush1.msra.mxu0 0.0
      %1039 = vmatprep.subr.mxu0 0.0
      %1040 = vmatpush1.msra.mxu0 0.0
      %1041 = vmatprep.subr.mxu0 0.0
      %1042 = vmatpush1.msra.mxu0 0.0
      %1043 = vmatprep.subr.mxu0 0.0
      %1044 = vmatpush1.msra.mxu0 0.0
      %1045 = vmatprep.subr.mxu0 0.0
      %1046 = vmatpush1.msra.mxu0 0.0
      %1047 = vmatprep.subr.mxu0 0.0
      %1048 = vmatpush1.msra.mxu0 0.0
      %1049 = vmatprep.subr.mxu0 0.0
      %1050 = vmatpush1.msra.mxu0 0.0
      %1051 = vmatprep.subr.mxu0 0.0
      %1052 = vmatpush1.msra.mxu0 0.0
      %1053 = vmatprep.subr.mxu0 0.0
      %1054 = vmatpush1.msra.mxu0 0.0
      %1055 = vmatprep.mubr.f32.mxu0 0.0
      %1056 = vmatmul.mubr.f32.gmra.mrb[0].mxu0 %v140
      %v1057 = vpop.f32.mrb[0].mxu0
      %v1058 = vadd.f32 0.0, %v1057
      %v1059 = vpop.f32.mrb[0].mxu0
      %v1060 = vadd.f32 0.0, %v1059
      %1061 = vdwg.mxu0
      %1062 = vmatprep.subr.mxu0 %v192
      %1063 = vmatpush1.msra.mxu0 %v190
      %1064 = vmatprep.subr.mxu0 0.0
      %1065 = vmatpush1.msra.mxu0 0.0
      %1066 = vmatprep.subr.mxu0 0.0
      %1067 = vmatpush1.msra.mxu0 0.0
      %1068 = vmatprep.subr.mxu0 0.0
      %1069 = vmatpush1.msra.mxu0 0.0
      %1070 = vmatprep.subr.mxu0 0.0
      %1071 = vmatpush1.msra.mxu0 0.0
      %1072 = vmatprep.subr.mxu0 0.0
      %1073 = vmatpush1.msra.mxu0 0.0
      %1074 = vmatprep.subr.mxu0 0.0
      %1075 = vmatpush1.msra.mxu0 0.0
      %1076 = vmatprep.subr.mxu0 0.0
      %1077 = vmatpush1.msra.mxu0 0.0
      %1078 = vmatprep.subr.mxu0 0.0
      %1079 = vmatpush1.msra.mxu0 0.0
      %1080 = vmatprep.subr.mxu0 0.0
      %1081 = vmatpush1.msra.mxu0 0.0
      %1082 = vmatprep.subr.mxu0 0.0
      %1083 = vmatpush1.msra.mxu0 0.0
      %1084 = vmatprep.subr.mxu0 0.0
      %1085 = vmatpush1.msra.mxu0 0.0
      %1086 = vmatprep.subr.mxu0 0.0
      %1087 = vmatpush1.msra.mxu0 0.0
      %1088 = vmatprep.subr.mxu0 0.0
      %1089 = vmatpush1.msra.mxu0 0.0
      %1090 = vmatprep.subr.mxu0 0.0
      %1091 = vmatpush1.msra.mxu0 0.0
      %1092 = vmatprep.subr.mxu0 0.0
      %1093 = vmatpush1.msra.mxu0 0.0
      %1094 = vmatprep.subr.mxu0 0.0
      %1095 = vmatpush1.msra.mxu0 0.0
      %1096 = vmatprep.subr.mxu0 0.0
      %1097 = vmatpush1.msra.mxu0 0.0
      %1098 = vmatprep.subr.mxu0 0.0
      %1099 = vmatpush1.msra.mxu0 0.0
      %1100 = vmatprep.subr.mxu0 0.0
      %1101 = vmatpush1.msra.mxu0 0.0
      %1102 = vmatprep.subr.mxu0 0.0
      %1103 = vmatpush1.msra.mxu0 0.0
      %1104 = vmatprep.subr.mxu0 0.0
      %1105 = vmatpush1.msra.mxu0 0.0
      %1106 = vmatprep.subr.mxu0 0.0
      %1107 = vmatpush1.msra.mxu0 0.0
      %1108 = vmatprep.subr.mxu0 0.0
      %1109 = vmatpush1.msra.mxu0 0.0
      %1110 = vmatprep.subr.mxu0 0.0
      %1111 = vmatpush1.msra.mxu0 0.0
      %1112 = vmatprep.subr.mxu0 0.0
      %1113 = vmatpush1.msra.mxu0 0.0
      %1114 = vmatprep.subr.mxu0 0.0
      %1115 = vmatpush1.msra.mxu0 0.0
      %1116 = vmatprep.subr.mxu0 0.0
      %1117 = vmatpush1.msra.mxu0 0.0
      %1118 = vmatprep.subr.mxu0 0.0
      %1119 = vmatpush1.msra.mxu0 0.0
      %1120 = vmatprep.subr.mxu0 0.0
      %1121 = vmatpush1.msra.mxu0 0.0
      %1122 = vmatprep.subr.mxu0 0.0
      %1123 = vmatpush1.msra.mxu0 0.0
      %1124 = vmatprep.subr.mxu0 0.0
      %1125 = vmatpush1.msra.mxu0 0.0
      %1126 = vmatprep.mubr.f32.mxu0 0.0
      %1127 = vmatmul.mubr.f32.gmra.mrb[0].mxu0 %v140
      %v1128 = vpop.f32.mrb[0].mxu0
      %v1129 = vadd.f32 0.0, %v1128
      %v1130 = vpop.f32.mrb[0].mxu0
      %v1131 = vadd.f32 0.0, %v1130
      %1132 = vdwg.mxu0
      %1133 = vmatprep.subr.mxu0 %v196
      %1134 = vmatpush1.msra.mxu0 %v194
      %1135 = vmatprep.subr.mxu0 0.0
      %1136 = vmatpush1.msra.mxu0 0.0
      %1137 = vmatprep.subr.mxu0 0.0
      %1138 = vmatpush1.msra.mxu0 0.0
      %1139 = vmatprep.subr.mxu0 0.0
      %1140 = vmatpush1.msra.mxu0 0.0
      %1141 = vmatprep.subr.mxu0 0.0
      %1142 = vmatpush1.msra.mxu0 0.0
      %1143 = vmatprep.subr.mxu0 0.0
      %1144 = vmatpush1.msra.mxu0 0.0
      %1145 = vmatprep.subr.mxu0 0.0
      %1146 = vmatpush1.msra.mxu0 0.0
      %1147 = vmatprep.subr.mxu0 0.0
      %1148 = vmatpush1.msra.mxu0 0.0
      %1149 = vmatprep.subr.mxu0 0.0
      %1150 = vmatpush1.msra.mxu0 0.0
      %1151 = vmatprep.subr.mxu0 0.0
      %1152 = vmatpush1.msra.mxu0 0.0
      %1153 = vmatprep.subr.mxu0 0.0
      %1154 = vmatpush1.msra.mxu0 0.0
      %1155 = vmatprep.subr.mxu0 0.0
      %1156 = vmatpush1.msra.mxu0 0.0
      %1157 = vmatprep.subr.mxu0 0.0
      %1158 = vmatpush1.msra.mxu0 0.0
      %1159 = vmatprep.subr.mxu0 0.0
      %1160 = vmatpush1.msra.mxu0 0.0
      %1161 = vmatprep.subr.mxu0 0.0
      %1162 = vmatpush1.msra.mxu0 0.0
      %1163 = vmatprep.subr.mxu0 0.0
      %1164 = vmatpush1.msra.mxu0 0.0
      %1165 = vmatprep.subr.mxu0 0.0
      %1166 = vmatpush1.msra.mxu0 0.0
      %1167 = vmatprep.subr.mxu0 0.0
      %1168 = vmatpush1.msra.mxu0 0.0
      %1169 = vmatprep.subr.mxu0 0.0
      %1170 = vmatpush1.msra.mxu0 0.0
      %1171 = vmatprep.subr.mxu0 0.0
      %1172 = vmatpush1.msra.mxu0 0.0
      %1173 = vmatprep.subr.mxu0 0.0
      %1174 = vmatpush1.msra.mxu0 0.0
      %1175 = vmatprep.subr.mxu0 0.0
      %1176 = vmatpush1.msra.mxu0 0.0
      %1177 = vmatprep.subr.mxu0 0.0
      %1178 = vmatpush1.msra.mxu0 0.0
      %1179 = vmatprep.subr.mxu0 0.0
      %1180 = vmatpush1.msra.mxu0 0.0
      %1181 = vmatprep.subr.mxu0 0.0
      %1182 = vmatpush1.msra.mxu0 0.0
      %1183 = vmatprep.subr.mxu0 0.0
      %1184 = vmatpush1.msra.mxu0 0.0
      %1185 = vmatprep.subr.mxu0 0.0
      %1186 = vmatpush1.msra.mxu0 0.0
      %1187 = vmatprep.subr.mxu0 0.0
      %1188 = vmatpush1.msra.mxu0 0.0
      %1189 = vmatprep.subr.mxu0 0.0
      %1190 = vmatpush1.msra.mxu0 0.0
      %1191 = vmatprep.subr.mxu0 0.0
      %1192 = vmatpush1.msra.mxu0 0.0
      %1193 = vmatprep.subr.mxu0 0.0
      %1194 = vmatpush1.msra.mxu0 0.0
      %1195 = vmatprep.subr.mxu0 0.0
      %1196 = vmatpush1.msra.mxu0 0.0
      %1197 = vmatprep.mubr.f32.mxu0 0.0
      %1198 = vmatmul.mubr.f32.gmra.mrb[0].mxu0 %v140
      %v1199 = vpop.f32.mrb[0].mxu0
      %v1200 = vadd.f32 0.0, %v1199
      %v1201 = vpop.f32.mrb[0].mxu0
      %v1202 = vadd.f32 0.0, %v1201
      %1203 = vdwg.mxu0
      %1204 = vmatprep.subr.mxu0 %v200
      %1205 = vmatpush1.msra.mxu0 %v198
      %1206 = vmatprep.subr.mxu0 0.0
      %1207 = vmatpush1.msra.mxu0 0.0
      %1208 = vmatprep.subr.mxu0 0.0
      %1209 = vmatpush1.msra.mxu0 0.0
      %1210 = vmatprep.subr.mxu0 0.0
      %1211 = vmatpush1.msra.mxu0 0.0
      %1212 = vmatprep.subr.mxu0 0.0
      %1213 = vmatpush1.msra.mxu0 0.0
      %1214 = vmatprep.subr.mxu0 0.0
      %1215 = vmatpush1.msra.mxu0 0.0
      %1216 = vmatprep.subr.mxu0 0.0
      %1217 = vmatpush1.msra.mxu0 0.0
      %1218 = vmatprep.subr.mxu0 0.0
      %1219 = vmatpush1.msra.mxu0 0.0
      %1220 = vmatprep.subr.mxu0 0.0
      %1221 = vmatpush1.msra.mxu0 0.0
      %1222 = vmatprep.subr.mxu0 0.0
      %1223 = vmatpush1.msra.mxu0 0.0
      %1224 = vmatprep.subr.mxu0 0.0
      %1225 = vmatpush1.msra.mxu0 0.0
      %1226 = vmatprep.subr.mxu0 0.0
      %1227 = vmatpush1.msra.mxu0 0.0
      %1228 = vmatprep.subr.mxu0 0.0
      %1229 = vmatpush1.msra.mxu0 0.0
      %1230 = vmatprep.subr.mxu0 0.0
      %1231 = vmatpush1.msra.mxu0 0.0
      %1232 = vmatprep.subr.mxu0 0.0
      %1233 = vmatpush1.msra.mxu0 0.0
      %1234 = vmatprep.subr.mxu0 0.0
      %1235 = vmatpush1.msra.mxu0 0.0
      %1236 = vmatprep.subr.mxu0 0.0
      %1237 = vmatpush1.msra.mxu0 0.0
      %1238 = vmatprep.subr.mxu0 0.0
      %1239 = vmatpush1.msra.mxu0 0.0
      %1240 = vmatprep.subr.mxu0 0.0
      %1241 = vmatpush1.msra.mxu0 0.0
      %1242 = vmatprep.subr.mxu0 0.0
      %1243 = vmatpush1.msra.mxu0 0.0
      %1244 = vmatprep.subr.mxu0 0.0
      %1245 = vmatpush1.msra.mxu0 0.0
      %1246 = vmatprep.subr.mxu0 0.0
      %1247 = vmatpush1.msra.mxu0 0.0
      %1248 = vmatprep.subr.mxu0 0.0
      %1249 = vmatpush1.msra.mxu0 0.0
      %1250 = vmatprep.subr.mxu0 0.0
      %1251 = vmatpush1.msra.mxu0 0.0
      %1252 = vmatprep.subr.mxu0 0.0
      %1253 = vmatpush1.msra.mxu0 0.0
      %1254 = vmatprep.subr.mxu0 0.0
      %1255 = vmatpush1.msra.mxu0 0.0
      %1256 = vmatprep.subr.mxu0 0.0
      %1257 = vmatpush1.msra.mxu0 0.0
      %1258 = vmatprep.subr.mxu0 0.0
      %1259 = vmatpush1.msra.mxu0 0.0
      %1260 = vmatprep.subr.mxu0 0.0
      %1261 = vmatpush1.msra.mxu0 0.0
      %1262 = vmatprep.subr.mxu0 0.0
      %1263 = vmatpush1.msra.mxu0 0.0
      %1264 = vmatprep.subr.mxu0 0.0
      %1265 = vmatpush1.msra.mxu0 0.0
      %1266 = vmatprep.subr.mxu0 0.0
      %1267 = vmatpush1.msra.mxu0 0.0
      %1268 = vmatprep.mubr.f32.mxu0 0.0
      %1269 = vmatmul.mubr.f32.gmra.mrb[0].mxu0 %v140
      %v1270 = vpop.f32.mrb[0].mxu0
      %v1271 = vadd.f32 0.0, %v1270
      %v1272 = vpop.f32.mrb[0].mxu0
      %v1273 = vadd.f32 0.0, %v1272
      %1274 = vdwg.mxu0
      %1275 = vmatprep.subr.mxu0 %v204
      %1276 = vmatpush1.msra.mxu0 %v202
      %1277 = vmatprep.subr.mxu0 0.0
      %1278 = vmatpush1.msra.mxu0 0.0
      %1279 = vmatprep.subr.mxu0 0.0
      %1280 = vmatpush1.msra.mxu0 0.0
      %1281 = vmatprep.subr.mxu0 0.0
      %1282 = vmatpush1.msra.mxu0 0.0
      %1283 = vmatprep.subr.mxu0 0.0
      %1284 = vmatpush1.msra.mxu0 0.0
      %1285 = vmatprep.subr.mxu0 0.0
      %1286 = vmatpush1.msra.mxu0 0.0
      %1287 = vmatprep.subr.mxu0 0.0
      %1288 = vmatpush1.msra.mxu0 0.0
      %1289 = vmatprep.subr.mxu0 0.0
      %1290 = vmatpush1.msra.mxu0 0.0
      %1291 = vmatprep.subr.mxu0 0.0
      %1292 = vmatpush1.msra.mxu0 0.0
      %1293 = vmatprep.subr.mxu0 0.0
      %1294 = vmatpush1.msra.mxu0 0.0
      %1295 = vmatprep.subr.mxu0 0.0
      %1296 = vmatpush1.msra.mxu0 0.0
      %1297 = vmatprep.subr.mxu0 0.0
      %1298 = vmatpush1.msra.mxu0 0.0
      %1299 = vmatprep.subr.mxu0 0.0
      %1300 = vmatpush1.msra.mxu0 0.0
      %1301 = vmatprep.subr.mxu0 0.0
      %1302 = vmatpush1.msra.mxu0 0.0
      %1303 = vmatprep.subr.mxu0 0.0
      %1304 = vmatpush1.msra.mxu0 0.0
      %1305 = vmatprep.subr.mxu0 0.0
      %1306 = vmatpush1.msra.mxu0 0.0
      %1307 = vmatprep.subr.mxu0 0.0
      %1308 = vmatpush1.msra.mxu0 0.0
      %1309 = vmatprep.subr.mxu0 0.0
      %1310 = vmatpush1.msra.mxu0 0.0
      %1311 = vmatprep.subr.mxu0 0.0
      %1312 = vmatpush1.msra.mxu0 0.0
      %1313 = vmatprep.subr.mxu0 0.0
      %1314 = vmatpush1.msra.mxu0 0.0
      %1315 = vmatprep.subr.mxu0 0.0
      %1316 = vmatpush1.msra.mxu0 0.0
      %1317 = vmatprep.subr.mxu0 0.0
      %1318 = vmatpush1.msra.mxu0 0.0
      %1319 = vmatprep.subr.mxu0 0.0
      %1320 = vmatpush1.msra.mxu0 0.0
      %1321 = vmatprep.subr.mxu0 0.0
      %1322 = vmatpush1.msra.mxu0 0.0
      %1323 = vmatprep.subr.mxu0 0.0
      %1324 = vmatpush1.msra.mxu0 0.0
      %1325 = vmatprep.subr.mxu0 0.0
      %1326 = vmatpush1.msra.mxu0 0.0
      %1327 = vmatprep.subr.mxu0 0.0
      %1328 = vmatpush1.msra.mxu0 0.0
      %1329 = vmatprep.subr.mxu0 0.0
      %1330 = vmatpush1.msra.mxu0 0.0
      %1331 = vmatprep.subr.mxu0 0.0
      %1332 = vmatpush1.msra.mxu0 0.0
      %1333 = vmatprep.subr.mxu0 0.0
      %1334 = vmatpush1.msra.mxu0 0.0
      %1335 = vmatprep.subr.mxu0 0.0
      %1336 = vmatpush1.msra.mxu0 0.0
      %1337 = vmatprep.subr.mxu0 0.0
      %1338 = vmatpush1.msra.mxu0 0.0
      %1339 = vmatprep.mubr.f32.mxu0 0.0
      %1340 = vmatmul.mubr.f32.gmra.mrb[0].mxu0 %v140
      %v1341 = vpop.f32.mrb[0].mxu0
      %v1342 = vadd.f32 0.0, %v1341
      %v1343 = vpop.f32.mrb[0].mxu0
      %v1344 = vadd.f32 0.0, %v1343
      %1345 = vdwg.mxu0
      %1346 = vmatprep.subr.mxu0 %v208
      %1347 = vmatpush1.msra.mxu0 %v206
      %1348 = vmatprep.subr.mxu0 0.0
      %1349 = vmatpush1.msra.mxu0 0.0
      %1350 = vmatprep.subr.mxu0 0.0
      %1351 = vmatpush1.msra.mxu0 0.0
      %1352 = vmatprep.subr.mxu0 0.0
      %1353 = vmatpush1.msra.mxu0 0.0
      %1354 = vmatprep.subr.mxu0 0.0
      %1355 = vmatpush1.msra.mxu0 0.0
      %1356 = vmatprep.subr.mxu0 0.0
      %1357 = vmatpush1.msra.mxu0 0.0
      %1358 = vmatprep.subr.mxu0 0.0
      %1359 = vmatpush1.msra.mxu0 0.0
      %1360 = vmatprep.subr.mxu0 0.0
      %1361 = vmatpush1.msra.mxu0 0.0
      %1362 = vmatprep.subr.mxu0 0.0
      %1363 = vmatpush1.msra.mxu0 0.0
      %1364 = vmatprep.subr.mxu0 0.0
      %1365 = vmatpush1.msra.mxu0 0.0
      %1366 = vmatprep.subr.mxu0 0.0
      %1367 = vmatpush1.msra.mxu0 0.0
      %1368 = vmatprep.subr.mxu0 0.0
      %1369 = vmatpush1.msra.mxu0 0.0
      %1370 = vmatprep.subr.mxu0 0.0
      %1371 = vmatpush1.msra.mxu0 0.0
      %1372 = vmatprep.subr.mxu0 0.0
      %1373 = vmatpush1.msra.mxu0 0.0
      %1374 = vmatprep.subr.mxu0 0.0
      %1375 = vmatpush1.msra.mxu0 0.0
      %1376 = vmatprep.subr.mxu0 0.0
      %1377 = vmatpush1.msra.mxu0 0.0
      %1378 = vmatprep.subr.mxu0 0.0
      %1379 = vmatpush1.msra.mxu0 0.0
      %1380 = vmatprep.subr.mxu0 0.0
      %1381 = vmatpush1.msra.mxu0 0.0
      %1382 = vmatprep.subr.mxu0 0.0
      %1383 = vmatpush1.msra.mxu0 0.0
      %1384 = vmatprep.subr.mxu0 0.0
      %1385 = vmatpush1.msra.mxu0 0.0
      %1386 = vmatprep.subr.mxu0 0.0
      %1387 = vmatpush1.msra.mxu0 0.0
      %1388 = vmatprep.subr.mxu0 0.0
      %1389 = vmatpush1.msra.mxu0 0.0
      %1390 = vmatprep.subr.mxu0 0.0
      %1391 = vmatpush1.msra.mxu0 0.0
      %1392 = vmatprep.subr.mxu0 0.0
      %1393 = vmatpush1.msra.mxu0 0.0
      %1394 = vmatprep.subr.mxu0 0.0
      %1395 = vmatpush1.msra.mxu0 0.0
      %1396 = vmatprep.subr.mxu0 0.0
      %1397 = vmatpush1.msra.mxu0 0.0
      %1398 = vmatprep.subr.mxu0 0.0
      %1399 = vmatpush1.msra.mxu0 0.0
      %1400 = vmatprep.subr.mxu0 0.0
      %1401 = vmatpush1.msra.mxu0 0.0
      %1402 = vmatprep.subr.mxu0 0.0
      %1403 = vmatpush1.msra.mxu0 0.0
      %1404 = vmatprep.subr.mxu0 0.0
      %1405 = vmatpush1.msra.mxu0 0.0
      %1406 = vmatprep.subr.mxu0 0.0
      %1407 = vmatpush1.msra.mxu0 0.0
      %1408 = vmatprep.subr.mxu0 0.0
      %1409 = vmatpush1.msra.mxu0 0.0
      %1410 = vmatprep.mubr.f32.mxu0 0.0
      %1411 = vmatmul.mubr.f32.gmra.mrb[0].mxu0 %v140
      %v1412 = vpop.f32.mrb[0].mxu0
      %v1413 = vadd.f32 0.0, %v1412
      %v1414 = vpop.f32.mrb[0].mxu0
      %v1415 = vadd.f32 0.0, %v1414
      %1416 = vdwg.mxu0
      %v1451 = vcombine.low %v277, %v279
      %v1452 = vcombine.low %v348, %v350
      %v1454 = vunpack.c.l.s4 1983009808
      %v1455 = vunpack.c.0.s8 %v1454
      %v1456 = vlaneseq
      %v1457 = vshrl.u32 %v1456, 7
      %v1458 = vsub.s32 %v1455, %v1457
      %v1459 = vrot.slane %v1451, %v1458
      %v1461 = vunpack.c.l.s4 1983009808
      %v1462 = vunpack.c.0.s8 %v1461
      %v1463 = vlaneseq
      %v1464 = vshrl.u32 %v1463, 7
      %v1465 = vsub.s32 %v1462, %v1464
      %v1466 = vrot.slane %v1452, %v1465
      %v1467 = vcombine.low %v1459, %v1466
      %v1468 = vcombine.low %v419, %v421
      %v1469 = vcombine.low %v490, %v492
      %v1471 = vunpack.c.l.s4 1983009808
      %v1472 = vunpack.c.0.s8 %v1471
      %v1473 = vlaneseq
      %v1474 = vshrl.u32 %v1473, 7
      %v1475 = vsub.s32 %v1472, %v1474
      %v1476 = vrot.slane %v1468, %v1475
      %v1478 = vunpack.c.l.s4 1983009808
      %v1479 = vunpack.c.0.s8 %v1478
      %v1480 = vlaneseq
      %v1481 = vshrl.u32 %v1480, 7
      %v1482 = vsub.s32 %v1479, %v1481
      %v1483 = vrot.slane %v1469, %v1482
      %v1484 = vcombine.low %v1476, %v1483
      %v1485 = vcombine.low %v561, %v563
      %v1486 = vcombine.low %v632, %v634
      %v1488 = vunpack.c.l.s4 1983009808
      %v1489 = vunpack.c.0.s8 %v1488
      %v1490 = vlaneseq
      %v1491 = vshrl.u32 %v1490, 7
      %v1492 = vsub.s32 %v1489, %v1491
      %v1493 = vrot.slane %v1485, %v1492
      %v1495 = vunpack.c.l.s4 1983009808
      %v1496 = vunpack.c.0.s8 %v1495
      %v1497 = vlaneseq
      %v1498 = vshrl.u32 %v1497, 7
      %v1499 = vsub.s32 %v1496, %v1498
      %v1500 = vrot.slane %v1486, %v1499
      %v1501 = vcombine.low %v1493, %v1500
      %v1502 = vcombine.low %v703, %v705
      %v1503 = vcombine.low %v774, %v776
      %v1505 = vunpack.c.l.s4 1983009808
      %v1506 = vunpack.c.0.s8 %v1505
      %v1507 = vlaneseq
      %v1508 = vshrl.u32 %v1507, 7
      %v1509 = vsub.s32 %v1506, %v1508
      %v1510 = vrot.slane %v1502, %v1509
      %v1512 = vunpack.c.l.s4 1983009808
      %v1513 = vunpack.c.0.s8 %v1512
      %v1514 = vlaneseq
      %v1515 = vshrl.u32 %v1514, 7
      %v1516 = vsub.s32 %v1513, %v1515
      %v1517 = vrot.slane %v1503, %v1516
      %v1518 = vcombine.low %v1510, %v1517
      %v1519 = vcombine.low %v845, %v847
      %v1520 = vcombine.low %v916, %v918
      %v1522 = vunpack.c.l.s4 1983009808
      %v1523 = vunpack.c.0.s8 %v1522
      %v1524 = vlaneseq
      %v1525 = vshrl.u32 %v1524, 7
      %v1526 = vsub.s32 %v1523, %v1525
      %v1527 = vrot.slane %v1519, %v1526
      %v1529 = vunpack.c.l.s4 1983009808
      %v1530 = vunpack.c.0.s8 %v1529
      %v1531 = vlaneseq
      %v1532 = vshrl.u32 %v1531, 7
      %v1533 = vsub.s32 %v1530, %v1532
      %v1534 = vrot.slane %v1520, %v1533
      %v1535 = vcombine.low %v1527, %v1534
      %v1536 = vcombine.low %v987, %v989
      %v1537 = vcombine.low %v1058, %v1060
      %v1539 = vunpack.c.l.s4 1983009808
      %v1540 = vunpack.c.0.s8 %v1539
      %v1541 = vlaneseq
      %v1542 = vshrl.u32 %v1541, 7
      %v1543 = vsub.s32 %v1540, %v1542
      %v1544 = vrot.slane %v1536, %v1543
      %v1546 = vunpack.c.l.s4 1983009808
      %v1547 = vunpack.c.0.s8 %v1546
      %v1548 = vlaneseq
      %v1549 = vshrl.u32 %v1548, 7
      %v1550 = vsub.s32 %v1547, %v1549
      %v1551 = vrot.slane %v1537, %v1550
      %v1552 = vcombine.low %v1544, %v1551
      %v1553 = vcombine.low %v1129, %v1131
      %v1554 = vcombine.low %v1200, %v1202
      %v1556 = vunpack.c.l.s4 1983009808
      %v1557 = vunpack.c.0.s8 %v1556
      %v1558 = vlaneseq
      %v1559 = vshrl.u32 %v1558, 7
      %v1560 = vsub.s32 %v1557, %v1559
      %v1561 = vrot.slane %v1553, %v1560
      %v1563 = vunpack.c.l.s4 1983009808
      %v1564 = vunpack.c.0.s8 %v1563
      %v1565 = vlaneseq
      %v1566 = vshrl.u32 %v1565, 7
      %v1567 = vsub.s32 %v1564, %v1566
      %v1568 = vrot.slane %v1554, %v1567
      %v1569 = vcombine.low %v1561, %v1568
      %v1570 = vcombine.low %v1271, %v1273
      %v1571 = vcombine.low %v1342, %v1344
      %v1573 = vunpack.c.l.s4 1983009808
      %v1574 = vunpack.c.0.s8 %v1573
      %v1575 = vlaneseq
      %v1576 = vshrl.u32 %v1575, 7
      %v1577 = vsub.s32 %v1574, %v1576
      %v1578 = vrot.slane %v1570, %v1577
      %v1580 = vunpack.c.l.s4 1983009808
      %v1581 = vunpack.c.0.s8 %v1580
      %v1582 = vlaneseq
      %v1583 = vshrl.u32 %v1582, 7
      %v1584 = vsub.s32 %v1581, %v1583
      %v1585 = vrot.slane %v1571, %v1584
      %v1586 = vcombine.low %v1578, %v1585
      %v1587 = vcombine.low %v1413, %v1415
      %v1589 = vunpack.c.l.s4 1983009808
      %v1590 = vunpack.c.0.s8 %v1589
      %v1591 = vlaneseq
      %v1592 = vshrl.u32 %v1591, 7
      %v1593 = vsub.s32 %v1590, %v1592
      %v1594 = vrot.slane %v1587, %v1593
      %1604 = vst [vmem:[#allocation8] sm:$0xff] %v1467
      %1605 = vst [vmem:[#allocation8 + $0x8] sm:$0xff] %v1484
      %1606 = vst [vmem:[#allocation8 + $0x10] sm:$0xff] %v1501
      %1607 = vst [vmem:[#allocation8 + $0x18] sm:$0xff] %v1518
      %1608 = vst [vmem:[#allocation8 + $0x20] sm:$0xff] %v1535
      %1609 = vst [vmem:[#allocation8 + $0x28] sm:$0xff] %v1552
      %1610 = vst [vmem:[#allocation8 + $0x30] sm:$0xff] %v1569
      %1611 = vst [vmem:[#allocation8 + $0x38] sm:$0xff] %v1586
      %1612 = vst [vmem:[#allocation8 + $0x40] sm:$0xf] %v1594
    $region25: #{tpu_custom_call.1} parent=1 // pred_fallthru
      _
    // Predicated region
    $region26: #{tpu_custom_call.1} parent=1 // pred_check
      _
    $region27: #{tpu_custom_call.1} parent=1 // pred_check_branch
      %1614 = sbr.rel (0) target = $region29
    $region28: #{tpu_custom_call.1} parent=1 // pred_region
      %s1616 = ssub.s32 1088, 1088
      %1617 = vsyncadd [#allocation5], %s1616
      %s1619 = sshll.u32 [#allocation8], 4
      %s1620 = int_to_ptr.vmem [resolvable:$true] %s1619
      %1622 = dma.vmem_to_hbm [thread:$0]  %s1620, 1088, %s2, [#allocation5]
    $region29: #{tpu_custom_call.1} parent=1 // pred_fallthru
      _
    // Predicated region
    $region30: #{tpu_custom_call.1} parent=1 // pred_check
      _
    $region31: #{tpu_custom_call.1} parent=1 // pred_check_branch
      %1624 = sbr.rel (0) target = $region33
    $region32: #{tpu_custom_call.1} parent=1 // pred_region
      %1625 = dma.done [#allocation5], 1088
    $region33: #{tpu_custom_call.1} parent=1 // pred_fallthru
      _
    %1626 = vsyncpa [#allocation4], 1
    %1627 = vsyncpa [#allocation7], 1
    %1628 = vsyncpa [#allocation5], 1

</llo_original>
